<compile_context>
chip_gen: v6e
topology: v6e:2x2x1
jax: 0.10.0
libtpu: 0.0.40
codegen_flags: <defaults>
</compile_context>

<pallas_src>
import math

import jax
import jax.numpy as jnp
from jax.experimental import pallas as pl
from jax.experimental.pallas import tpu as pltpu

F32 = jnp.float32
BF16 = jnp.bfloat16


# ----------------------------- Pallas kernels ------------------------------

def _vmem(n):
    return [pl.BlockSpec(memory_space=pltpu.MemorySpace.VMEM) for _ in range(n)]


# -- kernel 1: fused per-node-type input projection + ReLU (one call, all types)

def _make_multi_linear_relu_kernel(n_types):
    def kernel(*refs):
        xs = refs[0:n_types]
        ws = refs[n_types:2 * n_types]
        bs = refs[2 * n_types:3 * n_types]
        outs = refs[3 * n_types:4 * n_types]
        for x_ref, w_ref, b_ref, o_ref in zip(xs, ws, bs, outs):
            y = jnp.dot(x_ref[...].astype(BF16), w_ref[...],          # w pre-cast bf16
                        preferred_element_type=F32) + b_ref[...]
            o_ref[...] = jnp.maximum(y, 0.0)
    return kernel


def pallas_multi_linear_relu(x_list, w_list, b_list):
    n = len(x_list)
    out_shape = tuple(jax.ShapeDtypeStruct((x.shape[0], w.shape[1]), F32)
                      for x, w in zip(x_list, w_list))
    return pl.pallas_call(
        _make_multi_linear_relu_kernel(n),
        out_shape=out_shape,
        in_specs=_vmem(3 * n),
        out_specs=tuple(pl.BlockSpec(memory_space=pltpu.MemorySpace.VMEM)
                        for _ in range(n)),
    )(*x_list, *w_list, *b_list)


# -- kernel 2: ONE fused HGT layer (K|Q|V, all edge types, gelu/linear/skip) --

def _make_hgt_layer_kernel(node_types, edge_types, heads, head_dim):
    hidden = heads * head_dim
    nt = tuple(node_types)
    et = tuple(edge_types)

    def kernel(*refs):
        it = iter(refs)
        h_ref   = {t: next(it) for t in nt}      # (N_t, hidden) f32
        kqv_w   = {t: next(it) for t in nt}      # (hidden, 3*hidden) bf16
        kqv_b   = {t: next(it) for t in nt}      # (1, 3*hidden) f32
        a_w     = {t: next(it) for t in nt}      # (hidden, hidden) bf16
        a_b     = {t: next(it) for t in nt}      # (1, hidden) f32
        w_att   = {e: next(it) for e in et}      # (heads*D, D) bf16, prior/sqrt(D) folded
        w_msg   = {e: next(it) for e in et}      # (heads*D, D) bf16
        adj     = {e: next(it) for e in et}      # (N_d, N_s) int8
        o_ref   = {t: next(it) for t in nt}      # (N_t, hidden) f32 outputs
        agg_ref = {t: next(it) for t in nt}      # (N_t, hidden) f32 VMEM scratch

        # fused K|Q|V projection per node type (one lane-dense MXU op each);
        # results stay as values (vregs/VMEM), never round-trip HBM.
        h_val, kqv = {}, {}
        for t in nt:
            h_val[t] = h_ref[t][...]
            kqv[t] = (jnp.dot(h_val[t].astype(BF16), kqv_w[t][...],
                              preferred_element_type=F32) + kqv_b[t][...])
            agg_ref[t][...] = jnp.zeros_like(agg_ref[t])

        # per edge type: per-head relation transforms + masked softmax + aggregation
        for e in et:
            s, _, d = e
            k = kqv[s][:, 0:hidden]                       # lane slices of [K|Q|V]
            q = kqv[d][:, hidden:2 * hidden]
            v = kqv[s][:, 2 * hidden:3 * hidden]
            mask = adj[e][...] != 0                       # int8 -> bool, no f32 unpack
            wa_all = w_att[e][...]                        # (heads*D, D) bf16
            wm_all = w_msg[e][...]
            for hh in range(heads):
                sl = slice(hh * head_dim, (hh + 1) * head_dim)
                wa = wa_all[sl, :]
                wm = wm_all[sl, :]
                kh = jnp.dot(k[:, sl].astype(BF16), wa,
                             preferred_element_type=F32).astype(BF16)   # (Ns, D)
                vh = jnp.dot(v[:, sl].astype(BF16), wm,
                             preferred_element_type=F32).astype(BF16)   # (Ns, D)
                qh = q[:, sl].astype(BF16)                              # (Nd, D)
                sc = jax.lax.dot_general(qh, kh, (((1,), (1,)), ((), ())),
                                         preferred_element_type=F32)    # (Nd, Ns)
                sc = jnp.where(mask, sc, -1e30)
                smax = jnp.max(sc, axis=1, keepdims=True)
                p = jnp.exp(sc - smax)                                   # f32 softmax math
                p = jnp.where(mask, p, 0.0)
                denom = jnp.maximum(jnp.sum(p, axis=1, keepdims=True), 1e-30)
                attn = (p * pl.reciprocal(denom, approx=True)).astype(BF16)  # EUP divide
                msg = jnp.dot(attn, vh, preferred_element_type=F32)      # (Nd, D)
                # accumulate straight into the lane slice (group='sum', no concat)
                agg_ref[d][:, sl] += msg

        # target-specific update: gelu -> linear -> residual skip (still in VMEM)
        for t in nt:
            g = jax.nn.gelu(agg_ref[t][...], approximate=True)           # f32 elementwise
            o_ref[t][...] = (jnp.dot(g.astype(BF16), a_w[t][...],
                                     preferred_element_type=F32)
                             + a_b[t][...] + h_val[t])

    return kernel


def pallas_hgt_layer(h_dict, layer, adj_dict, node_types, edge_types,
                     num_nodes, heads, head_dim):
    hidden = heads * head_dim
    nt = tuple(node_types)
    et = tuple(edge_types)
    inputs = ([h_dict[t] for t in nt]
              + [layer['kqv_w'][t] for t in nt]
              + [layer['kqv_b'][t] for t in nt]
              + [layer['a_w'][t] for t in nt]
              + [layer['a_b'][t] for t in nt]
              + [layer['w_att'][e] for e in et]
              + [layer['w_msg'][e] for e in et]
              + [adj_dict[e] for e in et])
    out_shape = tuple(jax.ShapeDtypeStruct((num_nodes[t], hidden), F32) for t in nt)
    outs = pl.pallas_call(
        _make_hgt_layer_kernel(nt, et, heads, head_dim),
        out_shape=out_shape,
        in_specs=_vmem(len(inputs)),
        out_specs=tuple(pl.BlockSpec(memory_space=pltpu.MemorySpace.VMEM) for _ in nt),
        scratch_shapes=[pltpu.VMEM((num_nodes[t], hidden), F32) for t in nt],
    )(*inputs)
    return {t: outs[i] for i, t in enumerate(nt)}


# -- kernel 3: shared output projection (all node types concatenated) --------

def _linear_kernel(x_ref, w_ref, b_ref, o_ref):
    o_ref[...] = (jnp.dot(x_ref[...].astype(BF16), w_ref[...],
                          preferred_element_type=F32) + b_ref[...])


def pallas_linear(x, w, b):
    m, n = x.shape[0], w.shape[1]
    return pl.pallas_call(
        _linear_kernel,
        out_shape=jax.ShapeDtypeStruct((m, n), F32),
        in_specs=_vmem(3),
        out_specs=pl.BlockSpec(memory_space=pltpu.MemorySpace.VMEM),
    )(x, w, b)


# -- kernel 4: shared bilinear pair scorer, lane-dense (1, P) output ----------

def _pair_bilinear_kernel(wT_ref, ziT_ref, zjT_ref, b_ref, o_ref):
    # score[p] = z_i[p] @ W @ z_j[p] + bias, computed in transposed form so the
    # final reduction runs over sublanes and the (1, P) store is lane-dense.
    u = jnp.dot(wT_ref[...], ziT_ref[...].astype(BF16),
                preferred_element_type=F32)                      # (out, P)
    s = jnp.sum(u * zjT_ref[...], axis=0, keepdims=True)         # (1, P)
    o_ref[...] = s + b_ref[0]                                    # scalar bias (SMEM)


def pallas_pair_bilinear(wT, ziT, zjT, b):
    p = ziT.shape[1]
    return pl.pallas_call(
        _pair_bilinear_kernel,
        out_shape=jax.ShapeDtypeStruct((1, p), F32),
        in_specs=[pl.BlockSpec(memory_space=pltpu.MemorySpace.VMEM),
                  pl.BlockSpec(memory_space=pltpu.MemorySpace.VMEM),
                  pl.BlockSpec(memory_space=pltpu.MemorySpace.VMEM),
                  pl.BlockSpec(memory_space=pltpu.MemorySpace.SMEM)],
        out_specs=pl.BlockSpec(memory_space=pltpu.MemorySpace.VMEM),
    )(wT, ziT, zjT, b)


# ----------------------------- Parameter init ------------------------------

def init_params(key, node_types, edge_types, in_channels, hidden, out,
                num_layers, heads):
    head_dim = hidden // heads
    keys = iter(jax.random.split(key, 1024))

    def glorot(shape):
        fan_in = shape[-2] if len(shape) >= 2 else shape[-1]
        return jax.random.normal(next(keys), shape, F32) / math.sqrt(fan_in)

    params = {}
    params['lin_in'] = {
        t: {'w': glorot((in_channels[t], hidden)), 'b': jnp.zeros((hidden,), F32)}
        for t in node_types
    }
    params['layers'] = []
    for _ in range(num_layers):
        layer = {'kqv': {}, 'a': {}, 'rel': {}}
        for t in node_types:
            layer['kqv'][t] = {'w': glorot((hidden, 3 * hidden)),
                               'b': jnp.zeros((3 * hidden,), F32)}
            layer['a'][t] = {'w': glorot((hidden, hidden)),
                             'b': jnp.zeros((hidden,), F32)}
        for e in edge_types:
            layer['rel'][e] = {'w_att': glorot((heads, head_dim, head_dim)),
                               'w_msg': glorot((heads, head_dim, head_dim)),
                               'prior': jnp.ones((heads,), F32)}
        params['layers'].append(layer)
    params['lin_out'] = {'w': glorot((hidden, out)), 'b': jnp.zeros((out,), F32)}
    params['decoder'] = {'w': glorot((out, out)), 'b': jnp.zeros((1,), F32)}
    return params


def prepare_params(params, node_types, edge_types, heads, head_dim):
    """One-time prep: bf16 weights, (1,n) biases, prior/sqrt(D) folded into w_att,
    per-head relation weights stacked (heads*D, D), decoder W transposed."""
    prep = {}
    prep['lin_in'] = {t: {'w': params['lin_in'][t]['w'].astype(BF16),
                          'b': params['lin_in'][t]['b'].reshape(1, -1)}
                      for t in node_types}
    prep['layers'] = []
    for layer in params['layers']:
        L = {'kqv_w': {}, 'kqv_b': {}, 'a_w': {}, 'a_b': {}, 'w_att': {}, 'w_msg': {}}
        for t in node_types:
            L['kqv_w'][t] = layer['kqv'][t]['w'].astype(BF16)
            L['kqv_b'][t] = layer['kqv'][t]['b'].reshape(1, -1)
            L['a_w'][t] = layer['a'][t]['w'].astype(BF16)
            L['a_b'][t] = layer['a'][t]['b'].reshape(1, -1)
        for e in edge_types:
            rel = layer['rel'][e]
            scale = rel['prior'] / math.sqrt(head_dim)                  # (heads,)
            watt = rel['w_att'] * scale[:, None, None]
            L['w_att'][e] = watt.reshape(heads * head_dim, head_dim).astype(BF16)
            L['w_msg'][e] = rel['w_msg'].reshape(heads * head_dim, head_dim).astype(BF16)
        prep['layers'].append(L)
    prep['lin_out'] = {'w': params['lin_out']['w'].astype(BF16),
                       'b': params['lin_out']['b'].reshape(1, -1)}
    prep['decoder'] = {'wT': params['decoder']['w'].T.astype(BF16),
                       'b': params['decoder']['b']}
    return prep


# ------------------------------ Forward pass -------------------------------

def build_forward(node_types, edge_types, num_nodes, hidden, heads):
    head_dim = hidden // heads
    nt = tuple(node_types)
    et = tuple(edge_types)

    @jax.jit
    def forward(prep, x_dict, adj_dict, zi_idx, zj_idx):
        # encoder: per-type input projection + relu (ONE pallas_call for all types)
        h_list = pallas_multi_linear_relu(
            [x_dict[t] for t in nt],
            [prep['lin_in'][t]['w'] for t in nt],
            [prep['lin_in'][t]['b'] for t in nt])
        h_dict = {t: h_list[i] for i, t in enumerate(nt)}

        # HGT layers: ONE pallas_call each, all intermediates VMEM-resident
        for layer in prep['layers']:
            h_dict = pallas_hgt_layer(h_dict, layer, adj_dict, nt, et,
                                      num_nodes, heads, head_dim)

        # shared output projection: all node types concatenated, one call
        h_all = jnp.concatenate([h_dict[t] for t in nt], axis=0)
        z_all = pallas_linear(h_all, prep['lin_out']['w'], prep['lin_out']['b'])

        # decoder: gather query pairs (fused XLA gather inside jit), then one
        # bilinear kernel with lane-dense (1, P) output.
        # TODO(synk): for large query batches move the row gather into the kernel
        #             via PrefetchScalarGridSpec + pl.Element row index_maps.
        ziT = z_all[zi_idx].T                       # (out, P)
        zjT = z_all[zj_idx].T                       # (out, P)
        scores = pallas_pair_bilinear(prep['decoder']['wT'], ziT, zjT,
                                      prep['decoder']['b'])
        return scores[0]                            # (P,)

    return forward


# ---------------------------------- Main ------------------------------------

if __name__ == "__main__":
    key = jax.random.PRNGKey(0)

    node_types = ('drug', 'protein')
    edge_types = (('drug', 'binds', 'protein'), ('protein', 'rev_binds', 'drug'))
    num_nodes = {'drug': 24, 'protein': 16}
    in_channels = {'drug': 16, 'protein': 16}
    hidden_channels, out_channels = 32, 32
    num_layers, num_heads = 2, 2
    num_edge_types = 2
    n_pred = 10

    kx1, kx2, ke1, ke2, kl1, kl2 = jax.random.split(key, 6)

    x_dict = {
        'drug': jax.random.normal(kx1, (num_nodes['drug'], in_channels['drug']), F32),
        'protein': jax.random.normal(kx2, (num_nodes['protein'], in_channels['protein']), F32),
    }

    n_edges = 48
    ei1 = jnp.stack([jax.random.randint(ke1, (n_edges,), 0, num_nodes['drug']),
                     jax.random.randint(jax.random.fold_in(ke1, 1), (n_edges,), 0, num_nodes['protein'])])
    ei2 = jnp.stack([jax.random.randint(ke2, (n_edges,), 0, num_nodes['protein']),
                     jax.random.randint(jax.random.fold_in(ke2, 1), (n_edges,), 0, num_nodes['drug'])])
    edge_index_dict = {edge_types[0]: ei1, edge_types[1]: ei2}

    # link-prediction queries: (edge_pred_index, edge_name) per predicted edge type
    lbl_ddi = (jnp.stack([jax.random.randint(kl1, (n_pred,), 0, num_nodes['drug']),
                          jax.random.randint(jax.random.fold_in(kl1, 1), (n_pred,), 0, num_nodes['drug'])]),
               ('drug', 'ddi', 'drug'))
    lbl_dpi = (jnp.stack([jax.random.randint(kl2, (n_pred,), 0, num_nodes['drug']),
                          jax.random.randint(jax.random.fold_in(kl2, 1), (n_pred,), 0, num_nodes['protein'])]),
               ('drug', 'dpi', 'protein'))
    edge_label_index = [lbl_ddi, lbl_dpi]
    assert len(edge_label_index) == num_edge_types

    params = init_params(jax.random.PRNGKey(42), node_types, edge_types,
                         in_channels, hidden_channels, out_channels,
                         num_layers, num_heads)
    prep = prepare_params(params, node_types, edge_types, num_heads,
                          hidden_channels // num_heads)

    # graph-static glue hoisted off the per-step path: dense int8 adjacency (dst, src)
    adj_dict = {}
    for e, ei in edge_index_dict.items():
        s, _, d = e
        a = jnp.zeros((num_nodes[d], num_nodes[s]), jnp.int8)
        adj_dict[e] = a.at[ei[1], ei[0]].set(1)

    # query-pair row indices into the concatenated z_all (static offsets)
    offsets, off = {}, 0
    for t in node_types:
        offsets[t] = off
        off += num_nodes[t]
    zi_rows, zj_rows = [], []
    for (edge_pred_index, edge_name) in edge_label_index:
        i, _, j = edge_name
        node_in, node_out = edge_pred_index
        zi_rows.append(node_in + offsets[i])
        zj_rows.append(node_out + offsets[j])
    zi_idx = jnp.concatenate(zi_rows).astype(jnp.int32)
    zj_idx = jnp.concatenate(zj_rows).astype(jnp.int32)

    forward = build_forward(node_types, edge_types, num_nodes,
                            hidden_channels, num_heads)
    preds = forward(prep, x_dict, adj_dict, zi_idx, zj_idx)
    preds = jax.block_until_ready(preds)

    assert preds.shape == (num_edge_types * n_pred,), preds.shape
    assert preds.dtype == jnp.float32
    assert bool(jnp.all(jnp.isfinite(preds)))
    print("KERNEL_OK")
</pallas_src>

<mosaic_0001>
module attributes {stable_mosaic.version = 11 : i64} {
  func.func @kernel(%arg0: memref<24x16xf32, #tpu.memory_space<vmem>>, %arg1: memref<16x16xf32, #tpu.memory_space<vmem>>, %arg2: memref<16x32xbf16, #tpu.memory_space<vmem>>, %arg3: memref<16x32xbf16, #tpu.memory_space<vmem>>, %arg4: memref<1x32xf32, #tpu.memory_space<vmem>>, %arg5: memref<1x32xf32, #tpu.memory_space<vmem>>, %arg6: memref<24x32xf32, #tpu.memory_space<vmem>>, %arg7: memref<16x32xf32, #tpu.memory_space<vmem>>) attributes {dimension_semantics = [], scalar_prefetch = 0 : i64, scratch_operands = 0 : i64, tpu.core_type = #tpu.core_type<tc>} {
    %c0 = arith.constant 0 : index
    %c0_0 = arith.constant 0 : index
    %0 = vector.load %arg0[%c0, %c0_0] : memref<24x16xf32, #tpu.memory_space<vmem>>, vector<24x16xf32>
    %1 = arith.truncf %0 : vector<24x16xf32> to vector<24x16xbf16>
    %c0_1 = arith.constant 0 : index
    %c0_2 = arith.constant 0 : index
    %2 = vector.load %arg2[%c0_1, %c0_2] : memref<16x32xbf16, #tpu.memory_space<vmem>>, vector<16x32xbf16>
    %cst = arith.constant dense<0.000000e+00> : vector<24x32xf32>
    %3 = tpu.matmul %1, %2, %cst {dimension_numbers = #tpu.dot_dimension_numbers<[1], [0], [0], [1], [0, 0, 1, 1], [], []>} : vector<24x16xbf16>, vector<16x32xbf16>, vector<24x32xf32> -> vector<24x32xf32>
    %c0_3 = arith.constant 0 : index
    %c0_4 = arith.constant 0 : index
    %4 = vector.load %arg4[%c0_3, %c0_4] : memref<1x32xf32, #tpu.memory_space<vmem>>, vector<1x32xf32>
    %5 = vector.broadcast %4 : vector<1x32xf32> to vector<24x32xf32>
    %6 = arith.addf %3, %5 : vector<24x32xf32>
    %cst_5 = arith.constant 0.000000e+00 : f32
    %7 = vector.broadcast %cst_5 : f32 to vector<24x32xf32>
    %8 = arith.maximumf %6, %7 : vector<24x32xf32>
    %c0_6 = arith.constant 0 : index
    %c0_7 = arith.constant 0 : index
    %9 = vector.load %arg6[%c0_6, %c0_7] : memref<24x32xf32, #tpu.memory_space<vmem>>, vector<24x32xf32>
    tpu.vector_store %arg6[%c0_6, %c0_7], %8 {strides = array<i32>} : memref<24x32xf32, #tpu.memory_space<vmem>>, vector<24x32xf32>,
    %c0_8 = arith.constant 0 : index
    %c0_9 = arith.constant 0 : index
    %10 = vector.load %arg1[%c0_8, %c0_9] : memref<16x16xf32, #tpu.memory_space<vmem>>, vector<16x16xf32>
    %11 = arith.truncf %10 : vector<16x16xf32> to vector<16x16xbf16>
    %c0_10 = arith.constant 0 : index
    %c0_11 = arith.constant 0 : index
    %12 = vector.load %arg3[%c0_10, %c0_11] : memref<16x32xbf16, #tpu.memory_space<vmem>>, vector<16x32xbf16>
    %cst_12 = arith.constant dense<0.000000e+00> : vector<16x32xf32>
    %13 = tpu.matmul %11, %12, %cst_12 {dimension_numbers = #tpu.dot_dimension_numbers<[1], [0], [0], [1], [0, 0, 1, 1], [], []>} : vector<16x16xbf16>, vector<16x32xbf16>, vector<16x32xf32> -> vector<16x32xf32>
    %c0_13 = arith.constant 0 : index
    %c0_14 = arith.constant 0 : index
    %14 = vector.load %arg5[%c0_13, %c0_14] : memref<1x32xf32, #tpu.memory_space<vmem>>, vector<1x32xf32>
    %15 = vector.broadcast %14 : vector<1x32xf32> to vector<16x32xf32>
    %16 = arith.addf %13, %15 : vector<16x32xf32>
    %cst_15 = arith.constant 0.000000e+00 : f32
    %17 = vector.broadcast %cst_15 : f32 to vector<16x32xf32>
    %18 = arith.maximumf %16, %17 : vector<16x32xf32>
    %c0_16 = arith.constant 0 : index
    %c0_17 = arith.constant 0 : index
    %19 = vector.load %arg7[%c0_16, %c0_17] : memref<16x32xf32, #tpu.memory_space<vmem>>, vector<16x32xf32>
    tpu.vector_store %arg7[%c0_16, %c0_17], %18 {strides = array<i32>} : memref<16x32xf32, #tpu.memory_space<vmem>>, vector<16x32xf32>,
    return
  }
}

module attributes {stable_mosaic.version = 11 : i64} {
  func.func @kernel(%arg0: memref<24x32xf32, #tpu.memory_space<vmem>>, %arg1: memref<16x32xf32, #tpu.memory_space<vmem>>, %arg2: memref<32x96xbf16, #tpu.memory_space<vmem>>, %arg3: memref<32x96xbf16, #tpu.memory_space<vmem>>, %arg4: memref<1x96xf32, #tpu.memory_space<vmem>>, %arg5: memref<1x96xf32, #tpu.memory_space<vmem>>, %arg6: memref<32x32xbf16, #tpu.memory_space<vmem>>, %arg7: memref<32x32xbf16, #tpu.memory_space<vmem>>, %arg8: memref<1x32xf32, #tpu.memory_space<vmem>>, %arg9: memref<1x32xf32, #tpu.memory_space<vmem>>, %arg10: memref<32x16xbf16, #tpu.memory_space<vmem>>, %arg11: memref<32x16xbf16, #tpu.memory_space<vmem>>, %arg12: memref<32x16xbf16, #tpu.memory_space<vmem>>, %arg13: memref<32x16xbf16, #tpu.memory_space<vmem>>, %arg14: memref<16x24xi8, #tpu.memory_space<vmem>>, %arg15: memref<24x16xi8, #tpu.memory_space<vmem>>, %arg16: memref<24x32xf32, #tpu.memory_space<vmem>>, %arg17: memref<16x32xf32, #tpu.memory_space<vmem>>, %arg18: memref<24x32xf32, #tpu.memory_space<vmem>>, %arg19: memref<16x32xf32, #tpu.memory_space<vmem>>) attributes {dimension_semantics = [], scalar_prefetch = 0 : i64, scratch_operands = 2 : i64, tpu.core_type = #tpu.core_type<tc>} {
    %c0 = arith.constant 0 : index
    %c0_0 = arith.constant 0 : index
    %0 = vector.load %arg0[%c0, %c0_0] : memref<24x32xf32, #tpu.memory_space<vmem>>, vector<24x32xf32>
    %1 = arith.truncf %0 : vector<24x32xf32> to vector<24x32xbf16>
    %c0_1 = arith.constant 0 : index
    %c0_2 = arith.constant 0 : index
    %2 = vector.load %arg2[%c0_1, %c0_2] : memref<32x96xbf16, #tpu.memory_space<vmem>>, vector<32x96xbf16>
    %cst = arith.constant dense<0.000000e+00> : vector<24x96xf32>
    %3 = tpu.matmul %1, %2, %cst {dimension_numbers = #tpu.dot_dimension_numbers<[1], [0], [0], [1], [0, 0, 1, 1], [], []>} : vector<24x32xbf16>, vector<32x96xbf16>, vector<24x96xf32> -> vector<24x96xf32>
    %c0_3 = arith.constant 0 : index
    %c0_4 = arith.constant 0 : index
    %4 = vector.load %arg4[%c0_3, %c0_4] : memref<1x96xf32, #tpu.memory_space<vmem>>, vector<1x96xf32>
    %5 = vector.broadcast %4 : vector<1x96xf32> to vector<24x96xf32>
    %6 = arith.addf %3, %5 : vector<24x96xf32>
    %cst_5 = arith.constant 0.000000e+00 : f32
    %7 = vector.broadcast %cst_5 : f32 to vector<24x32xf32>
    %c0_6 = arith.constant 0 : index
    %c0_7 = arith.constant 0 : index
    %8 = vector.load %arg18[%c0_6, %c0_7] : memref<24x32xf32, #tpu.memory_space<vmem>>, vector<24x32xf32>
    tpu.vector_store %arg18[%c0_6, %c0_7], %7 {strides = array<i32>} : memref<24x32xf32, #tpu.memory_space<vmem>>, vector<24x32xf32>,
    %c0_8 = arith.constant 0 : index
    %c0_9 = arith.constant 0 : index
    %9 = vector.load %arg1[%c0_8, %c0_9] : memref<16x32xf32, #tpu.memory_space<vmem>>, vector<16x32xf32>
    %10 = arith.truncf %9 : vector<16x32xf32> to vector<16x32xbf16>
    %c0_10 = arith.constant 0 : index
    %c0_11 = arith.constant 0 : index
    %11 = vector.load %arg3[%c0_10, %c0_11] : memref<32x96xbf16, #tpu.memory_space<vmem>>, vector<32x96xbf16>
    %cst_12 = arith.constant dense<0.000000e+00> : vector<16x96xf32>
    %12 = tpu.matmul %10, %11, %cst_12 {dimension_numbers = #tpu.dot_dimension_numbers<[1], [0], [0], [1], [0, 0, 1, 1], [], []>} : vector<16x32xbf16>, vector<32x96xbf16>, vector<16x96xf32> -> vector<16x96xf32>
    %c0_13 = arith.constant 0 : index
    %c0_14 = arith.constant 0 : index
    %13 = vector.load %arg5[%c0_13, %c0_14] : memref<1x96xf32, #tpu.memory_space<vmem>>, vector<1x96xf32>
    %14 = vector.broadcast %13 : vector<1x96xf32> to vector<16x96xf32>
    %15 = arith.addf %12, %14 : vector<16x96xf32>
    %cst_15 = arith.constant 0.000000e+00 : f32
    %16 = vector.broadcast %cst_15 : f32 to vector<16x32xf32>
    %c0_16 = arith.constant 0 : index
    %c0_17 = arith.constant 0 : index
    %17 = vector.load %arg19[%c0_16, %c0_17] : memref<16x32xf32, #tpu.memory_space<vmem>>, vector<16x32xf32>
    tpu.vector_store %arg19[%c0_16, %c0_17], %16 {strides = array<i32>} : memref<16x32xf32, #tpu.memory_space<vmem>>, vector<16x32xf32>,
    %18 = vector.extract_strided_slice %6 {offsets = [0, 0], sizes = [24, 32], strides = [1, 1]} : vector<24x96xf32> to vector<24x32xf32>
    %19 = vector.extract_strided_slice %15 {offsets = [0, 32], sizes = [16, 32], strides = [1, 1]} : vector<16x96xf32> to vector<16x32xf32>
    %20 = vector.extract_strided_slice %6 {offsets = [0, 64], sizes = [24, 32], strides = [1, 1]} : vector<24x96xf32> to vector<24x32xf32>
    %c0_18 = arith.constant 0 : index
    %c0_19 = arith.constant 0 : index
    %21 = vector.load %arg14[%c0_18, %c0_19] : memref<16x24xi8, #tpu.memory_space<vmem>>, vector<16x24xi8>
    %c0_i8 = arith.constant 0 : i8
    %22 = vector.broadcast %c0_i8 : i8 to vector<16x24xi8>
    %23 = arith.cmpi ne, %21, %22 : vector<16x24xi8>
    %c0_20 = arith.constant 0 : index
    %c0_21 = arith.constant 0 : index
    %24 = vector.load %arg10[%c0_20, %c0_21] : memref<32x16xbf16, #tpu.memory_space<vmem>>, vector<32x16xbf16>
    %c0_22 = arith.constant 0 : index
    %c0_23 = arith.constant 0 : index
    %25 = vector.load %arg12[%c0_22, %c0_23] : memref<32x16xbf16, #tpu.memory_space<vmem>>, vector<32x16xbf16>
    %26 = vector.extract_strided_slice %24 {offsets = [0, 0], sizes = [16, 16], strides = [1, 1]} : vector<32x16xbf16> to vector<16x16xbf16>
    %27 = vector.extract_strided_slice %25 {offsets = [0, 0], sizes = [16, 16], strides = [1, 1]} : vector<32x16xbf16> to vector<16x16xbf16>
    %28 = vector.extract_strided_slice %18 {offsets = [0, 0], sizes = [24, 16], strides = [1, 1]} : vector<24x32xf32> to vector<24x16xf32>
    %29 = arith.truncf %28 : vector<24x16xf32> to vector<24x16xbf16>
    %cst_24 = arith.constant dense<0.000000e+00> : vector<24x16xf32>
    %30 = tpu.matmul %29, %26, %cst_24 {dimension_numbers = #tpu.dot_dimension_numbers<[1], [0], [0], [1], [0, 0, 1, 1], [], []>} : vector<24x16xbf16>, vector<16x16xbf16>, vector<24x16xf32> -> vector<24x16xf32>
    %31 = arith.truncf %30 : vector<24x16xf32> to vector<24x16xbf16>
    %32 = vector.extract_strided_slice %20 {offsets = [0, 0], sizes = [24, 16], strides = [1, 1]} : vector<24x32xf32> to vector<24x16xf32>
    %33 = arith.truncf %32 : vector<24x16xf32> to vector<24x16xbf16>
    %cst_25 = arith.constant dense<0.000000e+00> : vector<24x16xf32>
    %34 = tpu.matmul %33, %27, %cst_25 {dimension_numbers = #tpu.dot_dimension_numbers<[1], [0], [0], [1], [0, 0, 1, 1], [], []>} : vector<24x16xbf16>, vector<16x16xbf16>, vector<24x16xf32> -> vector<24x16xf32>
    %35 = arith.truncf %34 : vector<24x16xf32> to vector<24x16xbf16>
    %36 = vector.extract_strided_slice %19 {offsets = [0, 0], sizes = [16, 16], strides = [1, 1]} : vector<16x32xf32> to vector<16x16xf32>
    %37 = arith.truncf %36 : vector<16x16xf32> to vector<16x16xbf16>
    %cst_26 = arith.constant dense<0.000000e+00> : vector<16x24xf32>
    %38 = tpu.matmul %37, %31, %cst_26 {dimension_numbers = #tpu.dot_dimension_numbers<[1], [1], [0], [0], [0, 0, 1, 0], [], []>} : vector<16x16xbf16>, vector<24x16xbf16>, vector<16x24xf32> -> vector<16x24xf32>
    %cst_27 = arith.constant -1.000000e+30 : f32
    %39 = vector.broadcast %cst_27 : f32 to vector<16x24xf32>
    %40 = arith.select %23, %38, %39 : vector<16x24xi1>, vector<16x24xf32>
    %cst_28 = arith.constant dense<0xFF800000> : vector<16xf32>
    %41 = vector.multi_reduction <maximumf>, %40, %cst_28 [1] : vector<16x24xf32> to vector<16xf32>
    %42 = vector.shape_cast %41 : vector<16xf32> to vector<16x1xf32>
    %43 = vector.broadcast %42 : vector<16x1xf32> to vector<16x24xf32>
    %44 = arith.subf %40, %43 : vector<16x24xf32>
    %45 = math.exp %44 : vector<16x24xf32>
    %cst_29 = arith.constant 0.000000e+00 : f32
    %46 = vector.broadcast %cst_29 : f32 to vector<16x24xf32>
    %47 = arith.select %23, %45, %46 : vector<16x24xi1>, vector<16x24xf32>
    %cst_30 = arith.constant dense<0.000000e+00> : vector<16xf32>
    %48 = vector.multi_reduction <add>, %47, %cst_30 [1] : vector<16x24xf32> to vector<16xf32>
    %49 = vector.shape_cast %48 : vector<16xf32> to vector<16x1xf32>
    %cst_31 = arith.constant 1.000000e-30 : f32
    %50 = vector.broadcast %cst_31 : f32 to vector<16x1xf32>
    %51 = arith.maximumf %49, %50 : vector<16x1xf32>
    %52 = tpu.reciprocal %51 {approx = true} : vector<16x1xf32> -> vector<16x1xf32>
    %53 = vector.broadcast %52 : vector<16x1xf32> to vector<16x24xf32>
    %54 = arith.mulf %47, %53 : vector<16x24xf32>
    %55 = arith.truncf %54 : vector<16x24xf32> to vector<16x24xbf16>
    %cst_32 = arith.constant dense<0.000000e+00> : vector<16x16xf32>
    %56 = tpu.matmul %55, %35, %cst_32 {dimension_numbers = #tpu.dot_dimension_numbers<[1], [0], [0], [1], [0, 0, 1, 1], [], []>} : vector<16x24xbf16>, vector<24x16xbf16>, vector<16x16xf32> -> vector<16x16xf32>
    %c0_33 = arith.constant 0 : index
    %c0_34 = arith.constant 0 : index
    %57 = vector.load %arg19[%c0_33, %c0_34] : memref<16x32xf32, #tpu.memory_space<vmem>>, vector<16x16xf32>
    %58 = arith.addf %57, %56 : vector<16x16xf32>
    %c0_35 = arith.constant 0 : index
    %c0_36 = arith.constant 0 : index
    %59 = vector.load %arg19[%c0_35, %c0_36] : memref<16x32xf32, #tpu.memory_space<vmem>>, vector<16x16xf32>
    tpu.vector_store %arg19[%c0_35, %c0_36], %58 {strides = array<i32>} : memref<16x32xf32, #tpu.memory_space<vmem>>, vector<16x16xf32>,
    %60 = vector.extract_strided_slice %24 {offsets = [16, 0], sizes = [16, 16], strides = [1, 1]} : vector<32x16xbf16> to vector<16x16xbf16>
    %61 = vector.extract_strided_slice %25 {offsets = [16, 0], sizes = [16, 16], strides = [1, 1]} : vector<32x16xbf16> to vector<16x16xbf16>
    %62 = vector.extract_strided_slice %18 {offsets = [0, 16], sizes = [24, 16], strides = [1, 1]} : vector<24x32xf32> to vector<24x16xf32>
    %63 = arith.truncf %62 : vector<24x16xf32> to vector<24x16xbf16>
    %cst_37 = arith.constant dense<0.000000e+00> : vector<24x16xf32>
    %64 = tpu.matmul %63, %60, %cst_37 {dimension_numbers = #tpu.dot_dimension_numbers<[1], [0], [0], [1], [0, 0, 1, 1], [], []>} : vector<24x16xbf16>, vector<16x16xbf16>, vector<24x16xf32> -> vector<24x16xf32>
    %65 = arith.truncf %64 : vector<24x16xf32> to vector<24x16xbf16>
    %66 = vector.extract_strided_slice %20 {offsets = [0, 16], sizes = [24, 16], strides = [1, 1]} : vector<24x32xf32> to vector<24x16xf32>
    %67 = arith.truncf %66 : vector<24x16xf32> to vector<24x16xbf16>
    %cst_38 = arith.constant dense<0.000000e+00> : vector<24x16xf32>
    %68 = tpu.matmul %67, %61, %cst_38 {dimension_numbers = #tpu.dot_dimension_numbers<[1], [0], [0], [1], [0, 0, 1, 1], [], []>} : vector<24x16xbf16>, vector<16x16xbf16>, vector<24x16xf32> -> vector<24x16xf32>
    %69 = arith.truncf %68 : vector<24x16xf32> to vector<24x16xbf16>
    %70 = vector.extract_strided_slice %19 {offsets = [0, 16], sizes = [16, 16], strides = [1, 1]} : vector<16x32xf32> to vector<16x16xf32>
    %71 = arith.truncf %70 : vector<16x16xf32> to vector<16x16xbf16>
    %cst_39 = arith.constant dense<0.000000e+00> : vector<16x24xf32>
    %72 = tpu.matmul %71, %65, %cst_39 {dimension_numbers = #tpu.dot_dimension_numbers<[1], [1], [0], [0], [0, 0, 1, 0], [], []>} : vector<16x16xbf16>, vector<24x16xbf16>, vector<16x24xf32> -> vector<16x24xf32>
    %cst_40 = arith.constant -1.000000e+30 : f32
    %73 = vector.broadcast %cst_40 : f32 to vector<16x24xf32>
    %74 = arith.select %23, %72, %73 : vector<16x24xi1>, vector<16x24xf32>
    %cst_41 = arith.constant dense<0xFF800000> : vector<16xf32>
    %75 = vector.multi_reduction <maximumf>, %74, %cst_41 [1] : vector<16x24xf32> to vector<16xf32>
    %76 = vector.shape_cast %75 : vector<16xf32> to vector<16x1xf32>
    %77 = vector.broadcast %76 : vector<16x1xf32> to vector<16x24xf32>
    %78 = arith.subf %74, %77 : vector<16x24xf32>
    %79 = math.exp %78 : vector<16x24xf32>
    %cst_42 = arith.constant 0.000000e+00 : f32
    %80 = vector.broadcast %cst_42 : f32 to vector<16x24xf32>
    %81 = arith.select %23, %79, %80 : vector<16x24xi1>, vector<16x24xf32>
    %cst_43 = arith.constant dense<0.000000e+00> : vector<16xf32>
    %82 = vector.multi_reduction <add>, %81, %cst_43 [1] : vector<16x24xf32> to vector<16xf32>
    %83 = vector.shape_cast %82 : vector<16xf32> to vector<16x1xf32>
    %cst_44 = arith.constant 1.000000e-30 : f32
    %84 = vector.broadcast %cst_44 : f32 to vector<16x1xf32>
    %85 = arith.maximumf %83, %84 : vector<16x1xf32>
    %86 = tpu.reciprocal %85 {approx = true} : vector<16x1xf32> -> vector<16x1xf32>
    %87 = vector.broadcast %86 : vector<16x1xf32> to vector<16x24xf32>
    %88 = arith.mulf %81, %87 : vector<16x24xf32>
    %89 = arith.truncf %88 : vector<16x24xf32> to vector<16x24xbf16>
    %cst_45 = arith.constant dense<0.000000e+00> : vector<16x16xf32>
    %90 = tpu.matmul %89, %69, %cst_45 {dimension_numbers = #tpu.dot_dimension_numbers<[1], [0], [0], [1], [0, 0, 1, 1], [], []>} : vector<16x24xbf16>, vector<24x16xbf16>, vector<16x16xf32> -> vector<16x16xf32>
    %c0_46 = arith.constant 0 : index
    %c16 = arith.constant 16 : index
    %91 = vector.load %arg19[%c0_46, %c16] : memref<16x32xf32, #tpu.memory_space<vmem>>, vector<16x16xf32>
    %92 = arith.addf %91, %90 : vector<16x16xf32>
    %c0_47 = arith.constant 0 : index
    %c16_48 = arith.constant 16 : index
    %93 = vector.load %arg19[%c0_47, %c16_48] : memref<16x32xf32, #tpu.memory_space<vmem>>, vector<16x16xf32>
    tpu.vector_store %arg19[%c0_47, %c16_48], %92 {strides = array<i32>} : memref<16x32xf32, #tpu.memory_space<vmem>>, vector<16x16xf32>,
    %94 = vector.extract_strided_slice %15 {offsets = [0, 0], sizes = [16, 32], strides = [1, 1]} : vector<16x96xf32> to vector<16x32xf32>
    %95 = vector.extract_strided_slice %6 {offsets = [0, 32], sizes = [24, 32], strides = [1, 1]} : vector<24x96xf32> to vector<24x32xf32>
    %96 = vector.extract_strided_slice %15 {offsets = [0, 64], sizes = [16, 32], strides = [1, 1]} : vector<16x96xf32> to vector<16x32xf32>
    %c0_49 = arith.constant 0 : index
    %c0_50 = arith.constant 0 : index
    %97 = vector.load %arg15[%c0_49, %c0_50] : memref<24x16xi8, #tpu.memory_space<vmem>>, vector<24x16xi8>
    %c0_i8_51 = arith.constant 0 : i8
    %98 = vector.broadcast %c0_i8_51 : i8 to vector<24x16xi8>
    %99 = arith.cmpi ne, %97, %98 : vector<24x16xi8>
    %c0_52 = arith.constant 0 : index
    %c0_53 = arith.constant 0 : index
    %100 = vector.load %arg11[%c0_52, %c0_53] : memref<32x16xbf16, #tpu.memory_space<vmem>>, vector<32x16xbf16>
    %c0_54 = arith.constant 0 : index
    %c0_55 = arith.constant 0 : index
    %101 = vector.load %arg13[%c0_54, %c0_55] : memref<32x16xbf16, #tpu.memory_space<vmem>>, vector<32x16xbf16>
    %102 = vector.extract_strided_slice %100 {offsets = [0, 0], sizes = [16, 16], strides = [1, 1]} : vector<32x16xbf16> to vector<16x16xbf16>
    %103 = vector.extract_strided_slice %101 {offsets = [0, 0], sizes = [16, 16], strides = [1, 1]} : vector<32x16xbf16> to vector<16x16xbf16>
    %104 = vector.extract_strided_slice %94 {offsets = [0, 0], sizes = [16, 16], strides = [1, 1]} : vector<16x32xf32> to vector<16x16xf32>
    %105 = arith.truncf %104 : vector<16x16xf32> to vector<16x16xbf16>
    %cst_56 = arith.constant dense<0.000000e+00> : vector<16x16xf32>
    %106 = tpu.matmul %105, %102, %cst_56 {dimension_numbers = #tpu.dot_dimension_numbers<[1], [0], [0], [1], [0, 0, 1, 1], [], []>} : vector<16x16xbf16>, vector<16x16xbf16>, vector<16x16xf32> -> vector<16x16xf32>
    %107 = arith.truncf %106 : vector<16x16xf32> to vector<16x16xbf16>
    %108 = vector.extract_strided_slice %96 {offsets = [0, 0], sizes = [16, 16], strides = [1, 1]} : vector<16x32xf32> to vector<16x16xf32>
    %109 = arith.truncf %108 : vector<16x16xf32> to vector<16x16xbf16>
    %cst_57 = arith.constant dense<0.000000e+00> : vector<16x16xf32>
    %110 = tpu.matmul %109, %103, %cst_57 {dimension_numbers = #tpu.dot_dimension_numbers<[1], [0], [0], [1], [0, 0, 1, 1], [], []>} : vector<16x16xbf16>, vector<16x16xbf16>, vector<16x16xf32> -> vector<16x16xf32>
    %111 = arith.truncf %110 : vector<16x16xf32> to vector<16x16xbf16>
    %112 = vector.extract_strided_slice %95 {offsets = [0, 0], sizes = [24, 16], strides = [1, 1]} : vector<24x32xf32> to vector<24x16xf32>
    %113 = arith.truncf %112 : vector<24x16xf32> to vector<24x16xbf16>
    %cst_58 = arith.constant dense<0.000000e+00> : vector<24x16xf32>
    %114 = tpu.matmul %113, %107, %cst_58 {dimension_numbers = #tpu.dot_dimension_numbers<[1], [1], [0], [0], [0, 0, 1, 0], [], []>} : vector<24x16xbf16>, vector<16x16xbf16>, vector<24x16xf32> -> vector<24x16xf32>
    %cst_59 = arith.constant -1.000000e+30 : f32
    %115 = vector.broadcast %cst_59 : f32 to vector<24x16xf32>
    %116 = arith.select %99, %114, %115 : vector<24x16xi1>, vector<24x16xf32>
    %cst_60 = arith.constant dense<0xFF800000> : vector<24xf32>
    %117 = vector.multi_reduction <maximumf>, %116, %cst_60 [1] : vector<24x16xf32> to vector<24xf32>
    %118 = vector.shape_cast %117 : vector<24xf32> to vector<24x1xf32>
    %119 = vector.broadcast %118 : vector<24x1xf32> to vector<24x16xf32>
    %120 = arith.subf %116, %119 : vector<24x16xf32>
    %121 = math.exp %120 : vector<24x16xf32>
    %cst_61 = arith.constant 0.000000e+00 : f32
    %122 = vector.broadcast %cst_61 : f32 to vector<24x16xf32>
    %123 = arith.select %99, %121, %122 : vector<24x16xi1>, vector<24x16xf32>
    %cst_62 = arith.constant dense<0.000000e+00> : vector<24xf32>
    %124 = vector.multi_reduction <add>, %123, %cst_62 [1] : vector<24x16xf32> to vector<24xf32>
    %125 = vector.shape_cast %124 : vector<24xf32> to vector<24x1xf32>
    %cst_63 = arith.constant 1.000000e-30 : f32
    %126 = vector.broadcast %cst_63 : f32 to vector<24x1xf32>
    %127 = arith.maximumf %125, %126 : vector<24x1xf32>
    %128 = tpu.reciprocal %127 {approx = true} : vector<24x1xf32> -> vector<24x1xf32>
    %129 = vector.broadcast %128 : vector<24x1xf32> to vector<24x16xf32>
    %130 = arith.mulf %123, %129 : vector<24x16xf32>
    %131 = arith.truncf %130 : vector<24x16xf32> to vector<24x16xbf16>
    %cst_64 = arith.constant dense<0.000000e+00> : vector<24x16xf32>
    %132 = tpu.matmul %131, %111, %cst_64 {dimension_numbers = #tpu.dot_dimension_numbers<[1], [0], [0], [1], [0, 0, 1, 1], [], []>} : vector<24x16xbf16>, vector<16x16xbf16>, vector<24x16xf32> -> vector<24x16xf32>
    %c0_65 = arith.constant 0 : index
    %c0_66 = arith.constant 0 : index
    %133 = vector.load %arg18[%c0_65, %c0_66] : memref<24x32xf32, #tpu.memory_space<vmem>>, vector<24x16xf32>
    %134 = arith.addf %133, %132 : vector<24x16xf32>
    %c0_67 = arith.constant 0 : index
    %c0_68 = arith.constant 0 : index
    %135 = vector.load %arg18[%c0_67, %c0_68] : memref<24x32xf32, #tpu.memory_space<vmem>>, vector<24x16xf32>
    tpu.vector_store %arg18[%c0_67, %c0_68], %134 {strides = array<i32>} : memref<24x32xf32, #tpu.memory_space<vmem>>, vector<24x16xf32>,
    %136 = vector.extract_strided_slice %100 {offsets = [16, 0], sizes = [16, 16], strides = [1, 1]} : vector<32x16xbf16> to vector<16x16xbf16>
    %137 = vector.extract_strided_slice %101 {offsets = [16, 0], sizes = [16, 16], strides = [1, 1]} : vector<32x16xbf16> to vector<16x16xbf16>
    %138 = vector.extract_strided_slice %94 {offsets = [0, 16], sizes = [16, 16], strides = [1, 1]} : vector<16x32xf32> to vector<16x16xf32>
    %139 = arith.truncf %138 : vector<16x16xf32> to vector<16x16xbf16>
    %cst_69 = arith.constant dense<0.000000e+00> : vector<16x16xf32>
    %140 = tpu.matmul %139, %136, %cst_69 {dimension_numbers = #tpu.dot_dimension_numbers<[1], [0], [0], [1], [0, 0, 1, 1], [], []>} : vector<16x16xbf16>, vector<16x16xbf16>, vector<16x16xf32> -> vector<16x16xf32>
    %141 = arith.truncf %140 : vector<16x16xf32> to vector<16x16xbf16>
    %142 = vector.extract_strided_slice %96 {offsets = [0, 16], sizes = [16, 16], strides = [1, 1]} : vector<16x32xf32> to vector<16x16xf32>
    %143 = arith.truncf %142 : vector<16x16xf32> to vector<16x16xbf16>
    %cst_70 = arith.constant dense<0.000000e+00> : vector<16x16xf32>
    %144 = tpu.matmul %143, %137, %cst_70 {dimension_numbers = #tpu.dot_dimension_numbers<[1], [0], [0], [1], [0, 0, 1, 1], [], []>} : vector<16x16xbf16>, vector<16x16xbf16>, vector<16x16xf32> -> vector<16x16xf32>
    %145 = arith.truncf %144 : vector<16x16xf32> to vector<16x16xbf16>
    %146 = vector.extract_strided_slice %95 {offsets = [0, 16], sizes = [24, 16], strides = [1, 1]} : vector<24x32xf32> to vector<24x16xf32>
    %147 = arith.truncf %146 : vector<24x16xf32> to vector<24x16xbf16>
    %cst_71 = arith.constant dense<0.000000e+00> : vector<24x16xf32>
    %148 = tpu.matmul %147, %141, %cst_71 {dimension_numbers = #tpu.dot_dimension_numbers<[1], [1], [0], [0], [0, 0, 1, 0], [], []>} : vector<24x16xbf16>, vector<16x16xbf16>, vector<24x16xf32> -> vector<24x16xf32>
    %cst_72 = arith.constant -1.000000e+30 : f32
    %149 = vector.broadcast %cst_72 : f32 to vector<24x16xf32>
    %150 = arith.select %99, %148, %149 : vector<24x16xi1>, vector<24x16xf32>
    %cst_73 = arith.constant dense<0xFF800000> : vector<24xf32>
    %151 = vector.multi_reduction <maximumf>, %150, %cst_73 [1] : vector<24x16xf32> to vector<24xf32>
    %152 = vector.shape_cast %151 : vector<24xf32> to vector<24x1xf32>
    %153 = vector.broadcast %152 : vector<24x1xf32> to vector<24x16xf32>
    %154 = arith.subf %150, %153 : vector<24x16xf32>
    %155 = math.exp %154 : vector<24x16xf32>
    %cst_74 = arith.constant 0.000000e+00 : f32
    %156 = vector.broadcast %cst_74 : f32 to vector<24x16xf32>
    %157 = arith.select %99, %155, %156 : vector<24x16xi1>, vector<24x16xf32>
    %cst_75 = arith.constant dense<0.000000e+00> : vector<24xf32>
    %158 = vector.multi_reduction <add>, %157, %cst_75 [1] : vector<24x16xf32> to vector<24xf32>
    %159 = vector.shape_cast %158 : vector<24xf32> to vector<24x1xf32>
    %cst_76 = arith.constant 1.000000e-30 : f32
    %160 = vector.broadcast %cst_76 : f32 to vector<24x1xf32>
    %161 = arith.maximumf %159, %160 : vector<24x1xf32>
    %162 = tpu.reciprocal %161 {approx = true} : vector<24x1xf32> -> vector<24x1xf32>
    %163 = vector.broadcast %162 : vector<24x1xf32> to vector<24x16xf32>
    %164 = arith.mulf %157, %163 : vector<24x16xf32>
    %165 = arith.truncf %164 : vector<24x16xf32> to vector<24x16xbf16>
    %cst_77 = arith.constant dense<0.000000e+00> : vector<24x16xf32>
    %166 = tpu.matmul %165, %145, %cst_77 {dimension_numbers = #tpu.dot_dimension_numbers<[1], [0], [0], [1], [0, 0, 1, 1], [], []>} : vector<24x16xbf16>, vector<16x16xbf16>, vector<24x16xf32> -> vector<24x16xf32>
    %c0_78 = arith.constant 0 : index
    %c16_79 = arith.constant 16 : index
    %167 = vector.load %arg18[%c0_78, %c16_79] : memref<24x32xf32, #tpu.memory_space<vmem>>, vector<24x16xf32>
    %168 = arith.addf %167, %166 : vector<24x16xf32>
    %c0_80 = arith.constant 0 : index
    %c16_81 = arith.constant 16 : index
    %169 = vector.load %arg18[%c0_80, %c16_81] : memref<24x32xf32, #tpu.memory_space<vmem>>, vector<24x16xf32>
    tpu.vector_store %arg18[%c0_80, %c16_81], %168 {strides = array<i32>} : memref<24x32xf32, #tpu.memory_space<vmem>>, vector<24x16xf32>,
    %c0_82 = arith.constant 0 : index
    %c0_83 = arith.constant 0 : index
    %170 = vector.load %arg18[%c0_82, %c0_83] : memref<24x32xf32, #tpu.memory_space<vmem>>, vector<24x32xf32>
    %171 = arith.mulf %170, %170 : vector<24x32xf32>
    %172 = arith.mulf %170, %171 : vector<24x32xf32>
    %cst_84 = arith.constant 4.471500e-02 : f32
    %173 = vector.broadcast %cst_84 : f32 to vector<24x32xf32>
    %174 = arith.mulf %173, %172 : vector<24x32xf32>
    %175 = arith.addf %170, %174 : vector<24x32xf32>
    %cst_85 = arith.constant 0.797884583 : f32
    %176 = vector.broadcast %cst_85 : f32 to vector<24x32xf32>
    %177 = arith.mulf %176, %175 : vector<24x32xf32>
    %178 = math.tanh %177 : vector<24x32xf32>
    %cst_86 = arith.constant 1.000000e+00 : f32
    %179 = vector.broadcast %cst_86 : f32 to vector<24x32xf32>
    %180 = arith.addf %179, %178 : vector<24x32xf32>
    %cst_87 = arith.constant 5.000000e-01 : f32
    %181 = vector.broadcast %cst_87 : f32 to vector<24x32xf32>
    %182 = arith.mulf %181, %180 : vector<24x32xf32>
    %183 = arith.mulf %170, %182 : vector<24x32xf32>
    %184 = arith.truncf %183 : vector<24x32xf32> to vector<24x32xbf16>
    %c0_88 = arith.constant 0 : index
    %c0_89 = arith.constant 0 : index
    %185 = vector.load %arg6[%c0_88, %c0_89] : memref<32x32xbf16, #tpu.memory_space<vmem>>, vector<32x32xbf16>
    %cst_90 = arith.constant dense<0.000000e+00> : vector<24x32xf32>
    %186 = tpu.matmul %184, %185, %cst_90 {dimension_numbers = #tpu.dot_dimension_numbers<[1], [0], [0], [1], [0, 0, 1, 1], [], []>} : vector<24x32xbf16>, vector<32x32xbf16>, vector<24x32xf32> -> vector<24x32xf32>
    %c0_91 = arith.constant 0 : index
    %c0_92 = arith.constant 0 : index
    %187 = vector.load %arg8[%c0_91, %c0_92] : memref<1x32xf32, #tpu.memory_space<vmem>>, vector<1x32xf32>
    %188 = vector.broadcast %187 : vector<1x32xf32> to vector<24x32xf32>
    %189 = arith.addf %186, %188 : vector<24x32xf32>
    %190 = arith.addf %189, %0 : vector<24x32xf32>
    %c0_93 = arith.constant 0 : index
    %c0_94 = arith.constant 0 : index
    %191 = vector.load %arg16[%c0_93, %c0_94] : memref<24x32xf32, #tpu.memory_space<vmem>>, vector<24x32xf32>
    tpu.vector_store %arg16[%c0_93, %c0_94], %190 {strides = array<i32>} : memref<24x32xf32, #tpu.memory_space<vmem>>, vector<24x32xf32>,
    %c0_95 = arith.constant 0 : index
    %c0_96 = arith.constant 0 : index
    %192 = vector.load %arg19[%c0_95, %c0_96] : memref<16x32xf32, #tpu.memory_space<vmem>>, vector<16x32xf32>
    %193 = arith.mulf %192, %192 : vector<16x32xf32>
    %194 = arith.mulf %192, %193 : vector<16x32xf32>
    %cst_97 = arith.constant 4.471500e-02 : f32
    %195 = vector.broadcast %cst_97 : f32 to vector<16x32xf32>
    %196 = arith.mulf %195, %194 : vector<16x32xf32>
    %197 = arith.addf %192, %196 : vector<16x32xf32>
    %cst_98 = arith.constant 0.797884583 : f32
    %198 = vector.broadcast %cst_98 : f32 to vector<16x32xf32>
    %199 = arith.mulf %198, %197 : vector<16x32xf32>
    %200 = math.tanh %199 : vector<16x32xf32>
    %cst_99 = arith.constant 1.000000e+00 : f32
    %201 = vector.broadcast %cst_99 : f32 to vector<16x32xf32>
    %202 = arith.addf %201, %200 : vector<16x32xf32>
    %cst_100 = arith.constant 5.000000e-01 : f32
    %203 = vector.broadcast %cst_100 : f32 to vector<16x32xf32>
    %204 = arith.mulf %203, %202 : vector<16x32xf32>
    %205 = arith.mulf %192, %204 : vector<16x32xf32>
    %206 = arith.truncf %205 : vector<16x32xf32> to vector<16x32xbf16>
    %c0_101 = arith.constant 0 : index
    %c0_102 = arith.constant 0 : index
    %207 = vector.load %arg7[%c0_101, %c0_102] : memref<32x32xbf16, #tpu.memory_space<vmem>>, vector<32x32xbf16>
    %cst_103 = arith.constant dense<0.000000e+00> : vector<16x32xf32>
    %208 = tpu.matmul %206, %207, %cst_103 {dimension_numbers = #tpu.dot_dimension_numbers<[1], [0], [0], [1], [0, 0, 1, 1], [], []>} : vector<16x32xbf16>, vector<32x32xbf16>, vector<16x32xf32> -> vector<16x32xf32>
    %c0_104 = arith.constant 0 : index
    %c0_105 = arith.constant 0 : index
    %209 = vector.load %arg9[%c0_104, %c0_105] : memref<1x32xf32, #tpu.memory_space<vmem>>, vector<1x32xf32>
    %210 = vector.broadcast %209 : vector<1x32xf32> to vector<16x32xf32>
    %211 = arith.addf %208, %210 : vector<16x32xf32>
    %212 = arith.addf %211, %9 : vector<16x32xf32>
    %c0_106 = arith.constant 0 : index
    %c0_107 = arith.constant 0 : index
    %213 = vector.load %arg17[%c0_106, %c0_107] : memref<16x32xf32, #tpu.memory_space<vmem>>, vector<16x32xf32>
    tpu.vector_store %arg17[%c0_106, %c0_107], %212 {strides = array<i32>} : memref<16x32xf32, #tpu.memory_space<vmem>>, vector<16x32xf32>,
    return
  }
}

module attributes {stable_mosaic.version = 11 : i64} {
  func.func @_linear_kernel(%arg0: memref<40x32xf32, #tpu.memory_space<vmem>>, %arg1: memref<32x32xbf16, #tpu.memory_space<vmem>>, %arg2: memref<1x32xf32, #tpu.memory_space<vmem>>, %arg3: memref<40x32xf32, #tpu.memory_space<vmem>>) attributes {dimension_semantics = [], scalar_prefetch = 0 : i64, scratch_operands = 0 : i64, tpu.core_type = #tpu.core_type<tc>} {
    %c0 = arith.constant 0 : index
    %c0_0 = arith.constant 0 : index
    %0 = vector.load %arg0[%c0, %c0_0] : memref<40x32xf32, #tpu.memory_space<vmem>>, vector<40x32xf32>
    %1 = arith.truncf %0 : vector<40x32xf32> to vector<40x32xbf16>
    %c0_1 = arith.constant 0 : index
    %c0_2 = arith.constant 0 : index
    %2 = vector.load %arg1[%c0_1, %c0_2] : memref<32x32xbf16, #tpu.memory_space<vmem>>, vector<32x32xbf16>
    %cst = arith.constant dense<0.000000e+00> : vector<40x32xf32>
    %3 = tpu.matmul %1, %2, %cst {dimension_numbers = #tpu.dot_dimension_numbers<[1], [0], [0], [1], [0, 0, 1, 1], [], []>} : vector<40x32xbf16>, vector<32x32xbf16>, vector<40x32xf32> -> vector<40x32xf32>
    %c0_3 = arith.constant 0 : index
    %c0_4 = arith.constant 0 : index
    %4 = vector.load %arg2[%c0_3, %c0_4] : memref<1x32xf32, #tpu.memory_space<vmem>>, vector<1x32xf32>
    %5 = vector.broadcast %4 : vector<1x32xf32> to vector<40x32xf32>
    %6 = arith.addf %3, %5 : vector<40x32xf32>
    %c0_5 = arith.constant 0 : index
    %c0_6 = arith.constant 0 : index
    %7 = vector.load %arg3[%c0_5, %c0_6] : memref<40x32xf32, #tpu.memory_space<vmem>>, vector<40x32xf32>
    tpu.vector_store %arg3[%c0_5, %c0_6], %6 {strides = array<i32>} : memref<40x32xf32, #tpu.memory_space<vmem>>, vector<40x32xf32>,
    return
  }
}

module attributes {stable_mosaic.version = 11 : i64} {
  func.func @_pair_bilinear_kernel(%arg0: memref<32x32xbf16, #tpu.memory_space<vmem>>, %arg1: memref<32x20xf32, #tpu.memory_space<vmem>>, %arg2: memref<32x20xf32, #tpu.memory_space<vmem>>, %arg3: memref<1xf32, #tpu.memory_space<smem>>, %arg4: memref<1x20xf32, #tpu.memory_space<vmem>>) attributes {dimension_semantics = [], scalar_prefetch = 0 : i64, scratch_operands = 0 : i64, tpu.core_type = #tpu.core_type<tc>} {
    %c0 = arith.constant 0 : index
    %c0_0 = arith.constant 0 : index
    %0 = vector.load %arg0[%c0, %c0_0] : memref<32x32xbf16, #tpu.memory_space<vmem>>, vector<32x32xbf16>
    %c0_1 = arith.constant 0 : index
    %c0_2 = arith.constant 0 : index
    %1 = vector.load %arg1[%c0_1, %c0_2] : memref<32x20xf32, #tpu.memory_space<vmem>>, vector<32x20xf32>
    %2 = arith.truncf %1 : vector<32x20xf32> to vector<32x20xbf16>
    %cst = arith.constant dense<0.000000e+00> : vector<32x20xf32>
    %3 = tpu.matmul %0, %2, %cst {dimension_numbers = #tpu.dot_dimension_numbers<[1], [0], [0], [1], [0, 0, 1, 1], [], []>} : vector<32x32xbf16>, vector<32x20xbf16>, vector<32x20xf32> -> vector<32x20xf32>
    %c0_3 = arith.constant 0 : index
    %c0_4 = arith.constant 0 : index
    %4 = vector.load %arg2[%c0_3, %c0_4] : memref<32x20xf32, #tpu.memory_space<vmem>>, vector<32x20xf32>
    %5 = arith.mulf %3, %4 : vector<32x20xf32>
    %cst_5 = arith.constant dense<0.000000e+00> : vector<20xf32>
    %6 = vector.multi_reduction <add>, %5, %cst_5 [0] : vector<32x20xf32> to vector<20xf32>
    %7 = vector.shape_cast %6 : vector<20xf32> to vector<1x20xf32>
    %c0_6 = arith.constant 0 : index
    %8 = memref.load %arg3[%c0_6] : memref<1xf32, #tpu.memory_space<smem>>
    %9 = vector.broadcast %8 : f32 to vector<1x20xf32>
    %10 = arith.addf %7, %9 : vector<1x20xf32>
    %c0_7 = arith.constant 0 : index
    %c0_8 = arith.constant 0 : index
    %11 = vector.load %arg4[%c0_7, %c0_8] : memref<1x20xf32, #tpu.memory_space<vmem>>, vector<1x20xf32>
    tpu.vector_store %arg4[%c0_7, %c0_8], %10 {strides = array<i32>} : memref<1x20xf32, #tpu.memory_space<vmem>>, vector<1x20xf32>,
    return
  }
}

</mosaic_0001>

<llo_original>
// kernel: forward.8
$region0: #{forward.8}
  #allocation0 [shape = 'u32[]', space=smem, size = 0x4, offset = 0x4, fixed_abs, tag = 'smem constant byte address 0x4 - core index']
  #allocation1 [shape = 'u32[144,128]{1,0:T(1,128)}', space=vmem, size = 0x12000, scoped, tag = 'internal scratch']
  %s0 = inlined_call_operand.vmem [shape: f32[40,32], index: 0, kind: input, shape index: {}]
  %s1 = inlined_call_operand.vmem [shape: bf16[32,32], index: 1, kind: input, shape index: {}]
  %s2 = inlined_call_operand.vmem [shape: f32[1,32], index: 2, kind: input, shape index: {}]
  %s3 = inlined_call_operand.vmem [shape: f32[40,32], index: 3, kind: output, shape index: {}]
  %s4 = sld [smem:[#allocation0]]
  $region22: #{forward.8} parent=0
    _
  %s6 = ssub.s32 1, %s4
  %s7 = scalar_select 0, %s6, %s4
  // Predicated region
  $region2: #{forward.8} parent=0 // pred_check
    _
  $region3: #{forward.8} parent=0 // pred_check_branch
    %9 = sbr.rel (0) target = $region5
  $region4: #{forward.8} parent=0 // pred_region
    _
  $region5: #{forward.8} parent=0 // pred_fallthru
    _
  // Predicated region
  $region6: #{forward.8} parent=0 // pred_check
    _
  $region7: #{forward.8} parent=0 // pred_check_branch
    %11 = sbr.rel (0) target = $region9
  $region8: #{forward.8} parent=0 // pred_region
    _
  $region9: #{forward.8} parent=0 // pred_fallthru
    _
  // Predicated region
  $region10: #{forward.8} parent=0 // pred_check
    _
  $region11: #{forward.8} parent=0 // pred_check_branch
    %13 = sbr.rel (0) target = $region13
  $region12: #{forward.8} parent=0 // pred_region
    _
  $region13: #{forward.8} parent=0 // pred_fallthru
    _
  %v15 = vld [vmem:[%s0] sm:$0xff]
  %v16 = vld [vmem:[%s0 + $0x8] sm:$0xff]
  %v17 = vld [vmem:[%s0 + $0x10] sm:$0xff]
  %v18 = vld [vmem:[%s0 + $0x18] sm:$0xff]
  %v19 = vld [vmem:[%s0 + $0x20] sm:$0xff]
  %v20 = vpack.c.bf16 %v16, %v15
  %v21 = vpack.c.bf16 %v18, %v17
  %v22 = vpack.c.bf16 %v19, %v19
  %v23 = vld [vmem:[%s1] sm:$0xf]
  %v24 = vld [vmem:[%s1 + $0x4] sm:$0xf]
  %v25 = vld [vmem:[%s1 + $0x8] sm:$0xf]
  %v26 = vld [vmem:[%s1 + $0xc] sm:$0xf]
  %v27 = vld [vmem:[%s2] sm:$0x1]
  %v29 = vlaneseq
  %v30 = vshrl.u32 %v29, 7
  %v31 = vsub.s32 0, %v30
  %v32 = vrot.slane %v27, %v31
  %v38 = vunpack.c.l.b16 %v23
  %v39 = vunpack.c.l.b16 %v24
  %v40 = vunpack.c.l.b16 %v25
  %v41 = vunpack.c.l.b16 %v26
  %v42 = vpack.c.b16 %v39, %v38
  %v43 = vpack.c.b16 %v41, %v40
  %vm46 = vcmask 261120
  %v48 = vsel %vm46, %v20, 0
  %v51 = vsel %vm46, %v21, 0
  %v54 = vsel %vm46, %v22, 0
  %56 = vmatprep.subr.bf16.mxu0 0
  %57 = vmatpush1.bf16.msra.mxu0 0
  %58 = vmatprep.subr.bf16.mxu0 0
  %59 = vmatpush1.bf16.msra.mxu0 0
  %60 = vmatprep.subr.bf16.mxu0 0
  %61 = vmatpush1.bf16.msra.mxu0 0
  %62 = vmatprep.subr.bf16.mxu0 0
  %63 = vmatpush1.bf16.msra.mxu0 0
  %64 = vmatprep.subr.bf16.mxu0 0
  %65 = vmatpush1.bf16.msra.mxu0 0
  %66 = vmatprep.subr.bf16.mxu0 0
  %67 = vmatpush1.bf16.msra.mxu0 0
  %68 = vmatprep.subr.bf16.mxu0 0
  %69 = vmatpush1.bf16.msra.mxu0 %v43
  %70 = vmatprep.subr.bf16.mxu0 0
  %71 = vmatpush1.bf16.msra.mxu0 %v42
  %72 = vmatprep.subr.bf16.mxu0 0
  %73 = vmatpush2.bf16.msra.mxu0 0
  %74 = vmatprep.subr.bf16.mxu0 0
  %75 = vmatpush2.bf16.msra.mxu0 0
  %76 = vmatprep.subr.bf16.mxu0 0
  %77 = vmatpush2.bf16.msra.mxu0 0
  %78 = vmatprep.subr.bf16.mxu0 0
  %79 = vmatpush2.bf16.msra.mxu0 0
  %80 = vmatprep.subr.bf16.mxu0 0
  %81 = vmatpush2.bf16.msra.mxu0 0
  %82 = vmatprep.subr.bf16.mxu0 0
  %83 = vmatpush2.bf16.msra.mxu0 0
  %84 = vmatprep.subr.bf16.mxu0 0
  %85 = vmatpush2.bf16.msra.mxu0 0
  %86 = vmatprep.subr.bf16.mxu0 0
  %87 = vmatpush2.bf16.msra.mxu0 0
  %88 = vmatprep.mubr.bf16.mxu0 0
  %89 = vmatmul.mubr.bf16.gmra.mxu0 %v48
  %v90 = vpop.f32.mrf.mxu0
  %v91 = vadd.f32 %v32, %v90
  %v92 = vpop.f32.mrf.mxu0
  %v93 = vpop.f32.mrf.mxu0
  %v94 = vadd.f32 %v32, %v93
  %v95 = vpop.f32.mrf.mxu0
  %96 = vmatprep.mubr.bf16.mxu0 0
  %97 = vmatmul.mubr.bf16.gmra.mxu0 %v51
  %v98 = vpop.f32.mrf.mxu0
  %v99 = vadd.f32 %v32, %v98
  %v100 = vpop.f32.mrf.mxu0
  %v101 = vpop.f32.mrf.mxu0
  %v102 = vadd.f32 %v32, %v101
  %v103 = vpop.f32.mrf.mxu0
  %104 = vmatprep.mubr.bf16.mxu0 0
  %105 = vmatmul.mubr.bf16.gmra.mxu0 %v54
  %v106 = vpop.f32.mrf.mxu0
  %v107 = vadd.f32 %v32, %v106
  %v108 = vpop.f32.mrf.mxu0
  %v109 = vpop.f32.mrf.mxu0
  %v110 = vpop.f32.mrf.mxu0
  %111 = vdwg.mxu0
  %112 = vst.msk [vmem:[%s3] sm:$0xff] %vm46, %v91
  %113 = vst.msk [vmem:[%s3 + $0x8] sm:$0xff] %vm46, %v94
  %114 = vst.msk [vmem:[%s3 + $0x10] sm:$0xff] %vm46, %v99
  %115 = vst.msk [vmem:[%s3 + $0x18] sm:$0xff] %vm46, %v102
  %116 = vst.msk [vmem:[%s3 + $0x20] sm:$0xff] %vm46, %v107
  // Predicated region
  $region14: #{forward.8} parent=0 // pred_check
    _
  $region15: #{forward.8} parent=0 // pred_check_branch
    %118 = sbr.rel (0) target = $region17
  $region16: #{forward.8} parent=0 // pred_region
    _
  $region17: #{forward.8} parent=0 // pred_fallthru
    _
  // Predicated region
  $region18: #{forward.8} parent=0 // pred_check
    _
  $region19: #{forward.8} parent=0 // pred_check_branch
    %120 = sbr.rel (0) target = $region21
  $region20: #{forward.8} parent=0 // pred_region
    _
  $region21: #{forward.8} parent=0 // pred_fallthru
    _

// kernel: forward.5
$region0: #{forward.5}
  #allocation0 [shape = 'u32[]', space=smem, size = 0x4, offset = 0x4, fixed_abs, tag = 'smem constant byte address 0x4 - core index']
  #allocation1 [shape = 'u32[144,128]{1,0:T(1,128)}', space=vmem, size = 0x12000, scoped, tag = 'internal scratch']
  %s0 = inlined_call_operand.vmem [shape: f32[24,16], index: 0, kind: input, shape index: {}]
  %s1 = inlined_call_operand.vmem [shape: f32[16,16], index: 1, kind: input, shape index: {}]
  %s2 = inlined_call_operand.vmem [shape: bf16[16,32], index: 2, kind: input, shape index: {}]
  %s3 = inlined_call_operand.vmem [shape: bf16[16,32], index: 3, kind: input, shape index: {}]
  %s4 = inlined_call_operand.vmem [shape: f32[1,32], index: 4, kind: input, shape index: {}]
  %s5 = inlined_call_operand.vmem [shape: f32[1,32], index: 5, kind: input, shape index: {}]
  %s6 = inlined_call_operand.vmem [shape: f32[24,32], index: 6, kind: output, shape index: {0}]
  %s7 = inlined_call_operand.vmem [shape: f32[16,32], index: 7, kind: output, shape index: {1}]
  %8 = xla_tuple %s6, %s7
  %s9 = sld [smem:[#allocation0]]
  $region42: #{forward.5} parent=0
    _
  %s11 = ssub.s32 1, %s9
  %s12 = scalar_select 0, %s11, %s9
  // Predicated region
  $region2: #{forward.5} parent=0 // pred_check
    _
  $region3: #{forward.5} parent=0 // pred_check_branch
    %14 = sbr.rel (0) target = $region5
  $region4: #{forward.5} parent=0 // pred_region
    _
  $region5: #{forward.5} parent=0 // pred_fallthru
    _
  // Predicated region
  $region6: #{forward.5} parent=0 // pred_check
    _
  $region7: #{forward.5} parent=0 // pred_check_branch
    %16 = sbr.rel (0) target = $region9
  $region8: #{forward.5} parent=0 // pred_region
    _
  $region9: #{forward.5} parent=0 // pred_fallthru
    _
  // Predicated region
  $region10: #{forward.5} parent=0 // pred_check
    _
  $region11: #{forward.5} parent=0 // pred_check_branch
    %18 = sbr.rel (0) target = $region13
  $region12: #{forward.5} parent=0 // pred_region
    _
  $region13: #{forward.5} parent=0 // pred_fallthru
    _
  // Predicated region
  $region14: #{forward.5} parent=0 // pred_check
    _
  $region15: #{forward.5} parent=0 // pred_check_branch
    %20 = sbr.rel (0) target = $region17
  $region16: #{forward.5} parent=0 // pred_region
    _
  $region17: #{forward.5} parent=0 // pred_fallthru
    _
  // Predicated region
  $region18: #{forward.5} parent=0 // pred_check
    _
  $region19: #{forward.5} parent=0 // pred_check_branch
    %22 = sbr.rel (0) target = $region21
  $region20: #{forward.5} parent=0 // pred_region
    _
  $region21: #{forward.5} parent=0 // pred_fallthru
    _
  // Predicated region
  $region22: #{forward.5} parent=0 // pred_check
    _
  $region23: #{forward.5} parent=0 // pred_check_branch
    %24 = sbr.rel (0) target = $region25
  $region24: #{forward.5} parent=0 // pred_region
    _
  $region25: #{forward.5} parent=0 // pred_fallthru
    _
  %v26 = vld [vmem:[%s0] sm:$0xff]
  %v27 = vld [vmem:[%s0 + $0x8] sm:$0xff]
  %v28 = vld [vmem:[%s0 + $0x10] sm:$0xff]
  %v29 = vpack.c.bf16 %v27, %v26
  %v30 = vpack.c.bf16 %v28, %v28
  %v31 = vld [vmem:[%s2] sm:$0xf]
  %v32 = vld [vmem:[%s2 + $0x4] sm:$0xf]
  %v33 = vld [vmem:[%s4] sm:$0x1]
  %v35 = vlaneseq
  %v36 = vshrl.u32 %v35, 7
  %v37 = vsub.s32 0, %v36
  %v38 = vrot.slane %v33, %v37
  %v42 = vunpack.c.l.b16 %v31
  %v43 = vunpack.c.l.b16 %v32
  %v44 = vpack.c.b16 %v43, %v42
  %vm46 = vcmask 130048
  %v48 = vsel %vm46, %v29, 0
  %v51 = vsel %vm46, %v30, 0
  %53 = vmatprep.subr.bf16.mxu0 0
  %54 = vmatpush1.bf16.msra.mxu0 0
  %55 = vmatprep.subr.bf16.mxu0 0
  %56 = vmatpush1.bf16.msra.mxu0 0
  %57 = vmatprep.subr.bf16.mxu0 0
  %58 = vmatpush1.bf16.msra.mxu0 0
  %59 = vmatprep.subr.bf16.mxu0 0
  %60 = vmatpush1.bf16.msra.mxu0 0
  %61 = vmatprep.subr.bf16.mxu0 0
  %62 = vmatpush1.bf16.msra.mxu0 0
  %63 = vmatprep.subr.bf16.mxu0 0
  %64 = vmatpush1.bf16.msra.mxu0 0
  %65 = vmatprep.subr.bf16.mxu0 0
  %66 = vmatpush1.bf16.msra.mxu0 0
  %67 = vmatprep.subr.bf16.mxu0 0
  %68 = vmatpush1.bf16.msra.mxu0 %v44
  %69 = vmatprep.subr.bf16.mxu0 0
  %70 = vmatpush2.bf16.msra.mxu0 0
  %71 = vmatprep.subr.bf16.mxu0 0
  %72 = vmatpush2.bf16.msra.mxu0 0
  %73 = vmatprep.subr.bf16.mxu0 0
  %74 = vmatpush2.bf16.msra.mxu0 0
  %75 = vmatprep.subr.bf16.mxu0 0
  %76 = vmatpush2.bf16.msra.mxu0 0
  %77 = vmatprep.subr.bf16.mxu0 0
  %78 = vmatpush2.bf16.msra.mxu0 0
  %79 = vmatprep.subr.bf16.mxu0 0
  %80 = vmatpush2.bf16.msra.mxu0 0
  %81 = vmatprep.subr.bf16.mxu0 0
  %82 = vmatpush2.bf16.msra.mxu0 0
  %83 = vmatprep.subr.bf16.mxu0 0
  %84 = vmatpush2.bf16.msra.mxu0 0
  %85 = vmatprep.mubr.bf16.mxu0 0
  %86 = vmatmul.mubr.bf16.gmra.mxu0 %v48
  %v87 = vpop.f32.mrf.mxu0
  %v88 = vadd.f32 %v38, %v87
  %v89 = vpop.f32.mrf.mxu0
  %v90 = vpop.f32.mrf.mxu0
  %v91 = vadd.f32 %v38, %v90
  %v92 = vpop.f32.mrf.mxu0
  %93 = vmatprep.mubr.bf16.mxu0 0
  %94 = vmatmul.mubr.bf16.gmra.mxu0 %v51
  %v95 = vpop.f32.mrf.mxu0
  %v96 = vadd.f32 %v38, %v95
  %v97 = vpop.f32.mrf.mxu0
  %v98 = vpop.f32.mrf.mxu0
  %v99 = vpop.f32.mrf.mxu0
  %100 = vdwg.mxu0
  %v101 = vmax.f32 %v88, 0.0
  %v102 = vmax.f32 %v91, 0.0
  %v103 = vmax.f32 %v96, 0.0
  %vm104 = vcmask 261120
  %105 = vst.msk [vmem:[%s6] sm:$0xff] %vm104, %v101
  %106 = vst.msk [vmem:[%s6 + $0x8] sm:$0xff] %vm104, %v102
  %107 = vst.msk [vmem:[%s6 + $0x10] sm:$0xff] %vm104, %v103
  %v108 = vld [vmem:[%s1] sm:$0xff]
  %v109 = vld [vmem:[%s1 + $0x8] sm:$0xff]
  %v110 = vpack.c.bf16 %v109, %v108
  %v111 = vld [vmem:[%s3] sm:$0xf]
  %v112 = vld [vmem:[%s3 + $0x4] sm:$0xf]
  %v113 = vld [vmem:[%s5] sm:$0x1]
  %v115 = vlaneseq
  %v116 = vshrl.u32 %v115, 7
  %v117 = vsub.s32 0, %v116
  %v118 = vrot.slane %v113, %v117
  %v122 = vunpack.c.l.b16 %v111
  %v123 = vunpack.c.l.b16 %v112
  %v124 = vpack.c.b16 %v123, %v122
  %v127 = vsel %vm46, %v110, 0
  %129 = vmatprep.subr.bf16.mxu0 0
  %130 = vmatpush1.bf16.msra.mxu0 0
  %131 = vmatprep.subr.bf16.mxu0 0
  %132 = vmatpush1.bf16.msra.mxu0 0
  %133 = vmatprep.subr.bf16.mxu0 0
  %134 = vmatpush1.bf16.msra.mxu0 0
  %135 = vmatprep.subr.bf16.mxu0 0
  %136 = vmatpush1.bf16.msra.mxu0 0
  %137 = vmatprep.subr.bf16.mxu0 0
  %138 = vmatpush1.bf16.msra.mxu0 0
  %139 = vmatprep.subr.bf16.mxu0 0
  %140 = vmatpush1.bf16.msra.mxu0 0
  %141 = vmatprep.subr.bf16.mxu0 0
  %142 = vmatpush1.bf16.msra.mxu0 0
  %143 = vmatprep.subr.bf16.mxu0 0
  %144 = vmatpush1.bf16.msra.mxu0 %v124
  %145 = vmatprep.subr.bf16.mxu0 0
  %146 = vmatpush2.bf16.msra.mxu0 0
  %147 = vmatprep.subr.bf16.mxu0 0
  %148 = vmatpush2.bf16.msra.mxu0 0
  %149 = vmatprep.subr.bf16.mxu0 0
  %150 = vmatpush2.bf16.msra.mxu0 0
  %151 = vmatprep.subr.bf16.mxu0 0
  %152 = vmatpush2.bf16.msra.mxu0 0
  %153 = vmatprep.subr.bf16.mxu0 0
  %154 = vmatpush2.bf16.msra.mxu0 0
  %155 = vmatprep.subr.bf16.mxu0 0
  %156 = vmatpush2.bf16.msra.mxu0 0
  %157 = vmatprep.subr.bf16.mxu0 0
  %158 = vmatpush2.bf16.msra.mxu0 0
  %159 = vmatprep.subr.bf16.mxu0 0
  %160 = vmatpush2.bf16.msra.mxu0 0
  %161 = vmatprep.mubr.bf16.mxu0 0
  %162 = vmatmul.mubr.bf16.gmra.mxu0 %v127
  %v163 = vpop.f32.mrf.mxu0
  %v164 = vadd.f32 %v118, %v163
  %v165 = vpop.f32.mrf.mxu0
  %v166 = vpop.f32.mrf.mxu0
  %v167 = vadd.f32 %v118, %v166
  %v168 = vpop.f32.mrf.mxu0
  %169 = vdwg.mxu0
  %v170 = vmax.f32 %v164, 0.0
  %v171 = vmax.f32 %v167, 0.0
  %172 = vst.msk [vmem:[%s7] sm:$0xff] %vm104, %v170
  %173 = vst.msk [vmem:[%s7 + $0x8] sm:$0xff] %vm104, %v171
  // Predicated region
  $region26: #{forward.5} parent=0 // pred_check
    _
  $region27: #{forward.5} parent=0 // pred_check_branch
    %175 = sbr.rel (0) target = $region29
  $region28: #{forward.5} parent=0 // pred_region
    _
  $region29: #{forward.5} parent=0 // pred_fallthru
    _
  // Predicated region
  $region30: #{forward.5} parent=0 // pred_check
    _
  $region31: #{forward.5} parent=0 // pred_check_branch
    %177 = sbr.rel (0) target = $region33
  $region32: #{forward.5} parent=0 // pred_region
    _
  $region33: #{forward.5} parent=0 // pred_fallthru
    _
  // Predicated region
  $region34: #{forward.5} parent=0 // pred_check
    _
  $region35: #{forward.5} parent=0 // pred_check_branch
    %179 = sbr.rel (0) target = $region37
  $region36: #{forward.5} parent=0 // pred_region
    _
  $region37: #{forward.5} parent=0 // pred_fallthru
    _
  // Predicated region
  $region38: #{forward.5} parent=0 // pred_check
    _
  $region39: #{forward.5} parent=0 // pred_check_branch
    %181 = sbr.rel (0) target = $region41
  $region40: #{forward.5} parent=0 // pred_region
    _
  $region41: #{forward.5} parent=0 // pred_fallthru
    _

// kernel: forward.9
$region0: #{forward.9}
  #allocation0 [shape = 'u32[]', space=smem, size = 0x4, offset = 0x4, fixed_abs, tag = 'smem constant byte address 0x4 - core index']
  #allocation1 [shape = 'u32[144,128]{1,0:T(1,128)}', space=vmem, size = 0x12000, scoped, tag = 'internal scratch']
  #allocation2 [shape = 'f32[1]{0:T(128)S(6)}', space=smem, size = 0x200, scoped, tag = 'scoped memory for forward.9']
  %s0 = inlined_call_operand.vmem [shape: bf16[32,32], index: 0, kind: input, shape index: {}]
  %s1 = inlined_call_operand.vmem [shape: f32[32,20], index: 1, kind: input, shape index: {}]
  %s2 = inlined_call_operand.vmem [shape: f32[32,20], index: 2, kind: input, shape index: {}]
  %s3 = inlined_call_operand.<no memory space> [shape: f32[1], index: 3, kind: input, shape index: {}]
  %s4 = inlined_call_operand.hbm [shape: f32[1,20], index: 4, kind: output, shape index: {}]
  %s5 = sld [smem:[#allocation0]]
  $region26: #{forward.9} parent=0
    _
  %s7 = ssub.s32 1, %s5
  %s8 = scalar_select 0, %s7, %s5
  %9 = sst [smem:[#allocation2]] %s3
  $region1: #{forward.9} parent=0
    #allocation3 [shape = 'u8[512]{0}', space=vmem, size = 0x400, scoped, tag = 'output window, operand 0, single buffered']
    #allocation4 [shape = 's32[1]{0}', space=sflag, size = 0x4, scoped, tag = 'scoped memory for forward.9']
    %10 = vsyncpa [#allocation4], 0
    // Predicated region
    $region2: #{forward.9} parent=1 // pred_check
      _
    $region3: #{forward.9} parent=1 // pred_check_branch
      %12 = sbr.rel (0) target = $region5
    $region4: #{forward.9} parent=1 // pred_region
      _
    $region5: #{forward.9} parent=1 // pred_fallthru
      _
    // Predicated region
    $region6: #{forward.9} parent=1 // pred_check
      _
    $region7: #{forward.9} parent=1 // pred_check_branch
      %14 = sbr.rel (0) target = $region9
    $region8: #{forward.9} parent=1 // pred_region
      _
    $region9: #{forward.9} parent=1 // pred_fallthru
      _
    // Predicated region
    $region10: #{forward.9} parent=1 // pred_check
      _
    $region11: #{forward.9} parent=1 // pred_check_branch
      %16 = sbr.rel (0) target = $region13
    $region12: #{forward.9} parent=1 // pred_region
      _
    $region13: #{forward.9} parent=1 // pred_fallthru
      _
    // Predicated region
    $region14: #{forward.9} parent=1 // pred_check
      _
    $region15: #{forward.9} parent=1 // pred_check_branch
      %18 = sbr.rel (0) target = $region17
    $region16: #{forward.9} parent=1 // pred_region
      _
    $region17: #{forward.9} parent=1 // pred_fallthru
      _
    %v20 = vld [vmem:[%s0] sm:$0xf]
    %v21 = vld [vmem:[%s0 + $0x4] sm:$0xf]
    %v22 = vld [vmem:[%s0 + $0x8] sm:$0xf]
    %v23 = vld [vmem:[%s0 + $0xc] sm:$0xf]
    %v24 = vld [vmem:[%s1] sm:$0xff]
    %v25 = vld [vmem:[%s1 + $0x8] sm:$0xff]
    %v26 = vld [vmem:[%s1 + $0x10] sm:$0xff]
    %v27 = vld [vmem:[%s1 + $0x18] sm:$0xff]
    %v28 = vpack.c.bf16 %v25, %v24
    %v29 = vpack.c.bf16 %v27, %v26
    %v34 = vunpack.c.l.b16 %v20
    %v35 = vunpack.c.l.b16 %v21
    %v36 = vunpack.c.l.b16 %v22
    %v37 = vunpack.c.l.b16 %v23
    %v38 = vpack.c.b16 %v35, %v34
    %v39 = vpack.c.b16 %v37, %v36
    %vm40 = vcmask 261120
    %v42 = vsel %vm40, %v38, 0
    %v45 = vsel %vm40, %v39, 0
    %47 = vmatprep.subr.bf16.mxu0 0
    %48 = vmatpush1.bf16.msra.mxu0 0
    %49 = vmatprep.subr.bf16.mxu0 0
    %50 = vmatpush1.bf16.msra.mxu0 0
    %51 = vmatprep.subr.bf16.mxu0 0
    %52 = vmatpush1.bf16.msra.mxu0 0
    %53 = vmatprep.subr.bf16.mxu0 0
    %54 = vmatpush1.bf16.msra.mxu0 0
    %55 = vmatprep.subr.bf16.mxu0 0
    %56 = vmatpush1.bf16.msra.mxu0 0
    %57 = vmatprep.subr.bf16.mxu0 0
    %58 = vmatpush1.bf16.msra.mxu0 0
    %59 = vmatprep.subr.bf16.mxu0 0
    %60 = vmatpush1.bf16.msra.mxu0 %v29
    %61 = vmatprep.subr.bf16.mxu0 0
    %62 = vmatpush1.bf16.msra.mxu0 %v28
    %63 = vmatprep.subr.bf16.mxu0 0
    %64 = vmatpush2.bf16.msra.mxu0 0
    %65 = vmatprep.subr.bf16.mxu0 0
    %66 = vmatpush2.bf16.msra.mxu0 0
    %67 = vmatprep.subr.bf16.mxu0 0
    %68 = vmatpush2.bf16.msra.mxu0 0
    %69 = vmatprep.subr.bf16.mxu0 0
    %70 = vmatpush2.bf16.msra.mxu0 0
    %71 = vmatprep.subr.bf16.mxu0 0
    %72 = vmatpush2.bf16.msra.mxu0 0
    %73 = vmatprep.subr.bf16.mxu0 0
    %74 = vmatpush2.bf16.msra.mxu0 0
    %75 = vmatprep.subr.bf16.mxu0 0
    %76 = vmatpush2.bf16.msra.mxu0 0
    %77 = vmatprep.subr.bf16.mxu0 0
    %78 = vmatpush2.bf16.msra.mxu0 0
    %79 = vmatprep.mubr.bf16.mxu0 0
    %80 = vmatmul.mubr.bf16.gmra.mxu0 %v42
    %v81 = vpop.f32.mrf.mxu0
    %v82 = vadd.f32 0.0, %v81
    %v83 = vpop.f32.mrf.mxu0
    %v84 = vpop.f32.mrf.mxu0
    %v85 = vadd.f32 0.0, %v84
    %v86 = vpop.f32.mrf.mxu0
    %87 = vmatprep.mubr.bf16.mxu0 0
    %88 = vmatmul.mubr.bf16.gmra.mxu0 %v45
    %v89 = vpop.f32.mrf.mxu0
    %v90 = vadd.f32 0.0, %v89
    %v91 = vpop.f32.mrf.mxu0
    %v92 = vpop.f32.mrf.mxu0
    %v93 = vadd.f32 0.0, %v92
    %v94 = vpop.f32.mrf.mxu0
    %95 = vdwg.mxu0
    %v96 = vld [vmem:[%s2] sm:$0xff]
    %v97 = vld [vmem:[%s2 + $0x8] sm:$0xff]
    %v98 = vld [vmem:[%s2 + $0x10] sm:$0xff]
    %v99 = vld [vmem:[%s2 + $0x18] sm:$0xff]
    %v100 = vmul.f32 %v82, %v96
    %v101 = vmul.f32 %v85, %v97
    %v102 = vmul.f32 %v90, %v98
    %v103 = vmul.f32 %v93, %v99
    %vm104 = vcmask 162816
    %v105 = vsel %vm104, %v100, 0.0
    %v106 = vsel %vm104, %v101, 0.0
    %v107 = vadd.f32 %v105, %v106
    %v108 = vsel %vm104, %v102, 0.0
    %v109 = vadd.f32 %v107, %v108
    %v110 = vsel %vm104, %v103, 0.0
    %v111 = vadd.f32 %v109, %v110
    %v112 = vrot.slane %v111, 4
    %v113 = vadd.f32 %v111, %v112
    %v114 = vrot.slane %v113, 2
    %v115 = vadd.f32 %v113, %v114
    %v116 = vrot.slane %v115, 1
    %v117 = vadd.f32 %v115, %v116
    %s118 = sld [smem:[#allocation2]]
    %v119 = vstv %s118
    %v120 = vadd.f32 %v117, %v119
    %vm121 = vcmask 155648
    %122 = vst.msk [vmem:[#allocation3] sm:$0x1] %vm121, %v120
    // Predicated region
    $region18: #{forward.9} parent=1 // pred_check
      _
    $region19: #{forward.9} parent=1 // pred_check_branch
      %124 = sbr.rel (0) target = $region21
    $region20: #{forward.9} parent=1 // pred_region
      %s126 = ssub.s32 16, 16
      %127 = vsyncadd [#allocation4], %s126
      %s129 = sshll.u32 [#allocation3], 4
      %s130 = int_to_ptr.vmem [resolvable:$true] %s129
      %132 = dma.vmem_to_hbm [thread:$0]  %s130, 16, %s4, [#allocation4]
    $region21: #{forward.9} parent=1 // pred_fallthru
      _
    // Predicated region
    $region22: #{forward.9} parent=1 // pred_check
      _
    $region23: #{forward.9} parent=1 // pred_check_branch
      %134 = sbr.rel (0) target = $region25
    $region24: #{forward.9} parent=1 // pred_region
      %135 = dma.done [#allocation4], 16
    $region25: #{forward.9} parent=1 // pred_fallthru
      _
    %136 = vsyncpa [#allocation4], 1

// kernel: forward.6
$region0: #{forward.6}
  #allocation0 [shape = 'u32[]', space=smem, size = 0x4, offset = 0x4, fixed_abs, tag = 'smem constant byte address 0x4 - core index']
  #allocation1 [shape = 'u32[144,128]{1,0:T(1,128)}', space=vmem, size = 0x12000, scoped, tag = 'internal scratch']
  #allocation2 [shape = 'f32[24,32]{1,0:T(8,128)}', space=vmem, size = 0x3000, scoped, tag = 'scratch operand']
  #allocation3 [shape = 'f32[16,32]{1,0:T(8,128)}', space=vmem, size = 0x2000, scoped, tag = 'scratch operand']
  %s0 = inlined_call_operand.vmem [shape: f32[24,32], index: 0, kind: input, shape index: {}]
  %s1 = inlined_call_operand.vmem [shape: f32[16,32], index: 1, kind: input, shape index: {}]
  %s2 = inlined_call_operand.vmem [shape: bf16[32,96], index: 2, kind: input, shape index: {}]
  %s3 = inlined_call_operand.vmem [shape: bf16[32,96], index: 3, kind: input, shape index: {}]
  %s4 = inlined_call_operand.vmem [shape: f32[1,96], index: 4, kind: input, shape index: {}]
  %s5 = inlined_call_operand.vmem [shape: f32[1,96], index: 5, kind: input, shape index: {}]
  %s6 = inlined_call_operand.vmem [shape: bf16[32,32], index: 6, kind: input, shape index: {}]
  %s7 = inlined_call_operand.vmem [shape: bf16[32,32], index: 7, kind: input, shape index: {}]
  %s8 = inlined_call_operand.vmem [shape: f32[1,32], index: 8, kind: input, shape index: {}]
  %s9 = inlined_call_operand.vmem [shape: f32[1,32], index: 9, kind: input, shape index: {}]
  %s10 = inlined_call_operand.vmem [shape: bf16[32,16], index: 10, kind: input, shape index: {}]
  %s11 = inlined_call_operand.vmem [shape: bf16[32,16], index: 11, kind: input, shape index: {}]
  %s12 = inlined_call_operand.vmem [shape: bf16[32,16], index: 12, kind: input, shape index: {}]
  %s13 = inlined_call_operand.vmem [shape: bf16[32,16], index: 13, kind: input, shape index: {}]
  %s14 = inlined_call_operand.vmem [shape: s8[16,24], index: 14, kind: input, shape index: {}]
  %s15 = inlined_call_operand.vmem [shape: s8[24,16], index: 15, kind: input, shape index: {}]
  %s16 = inlined_call_operand.vmem [shape: f32[24,32], index: 16, kind: output, shape index: {0}]
  %s17 = inlined_call_operand.vmem [shape: f32[16,32], index: 17, kind: output, shape index: {1}]
  %18 = xla_tuple %s16, %s17
  %s19 = sld [smem:[#allocation0]]
  $region82: #{forward.6} parent=0
    _
  %s21 = ssub.s32 1, %s19
  %s22 = scalar_select 0, %s21, %s19
  // Predicated region
  $region2: #{forward.6} parent=0 // pred_check
    _
  $region3: #{forward.6} parent=0 // pred_check_branch
    %24 = sbr.rel (0) target = $region5
  $region4: #{forward.6} parent=0 // pred_region
    _
  $region5: #{forward.6} parent=0 // pred_fallthru
    _
  // Predicated region
  $region6: #{forward.6} parent=0 // pred_check
    _
  $region7: #{forward.6} parent=0 // pred_check_branch
    %26 = sbr.rel (0) target = $region9
  $region8: #{forward.6} parent=0 // pred_region
    _
  $region9: #{forward.6} parent=0 // pred_fallthru
    _
  // Predicated region
  $region10: #{forward.6} parent=0 // pred_check
    _
  $region11: #{forward.6} parent=0 // pred_check_branch
    %28 = sbr.rel (0) target = $region13
  $region12: #{forward.6} parent=0 // pred_region
    _
  $region13: #{forward.6} parent=0 // pred_fallthru
    _
  // Predicated region
  $region14: #{forward.6} parent=0 // pred_check
    _
  $region15: #{forward.6} parent=0 // pred_check_branch
    %30 = sbr.rel (0) target = $region17
  $region16: #{forward.6} parent=0 // pred_region
    _
  $region17: #{forward.6} parent=0 // pred_fallthru
    _
  // Predicated region
  $region18: #{forward.6} parent=0 // pred_check
    _
  $region19: #{forward.6} parent=0 // pred_check_branch
    %32 = sbr.rel (0) target = $region21
  $region20: #{forward.6} parent=0 // pred_region
    _
  $region21: #{forward.6} parent=0 // pred_fallthru
    _
  // Predicated region
  $region22: #{forward.6} parent=0 // pred_check
    _
  $region23: #{forward.6} parent=0 // pred_check_branch
    %34 = sbr.rel (0) target = $region25
  $region24: #{forward.6} parent=0 // pred_region
    _
  $region25: #{forward.6} parent=0 // pred_fallthru
    _
  // Predicated region
  $region26: #{forward.6} parent=0 // pred_check
    _
  $region27: #{forward.6} parent=0 // pred_check_branch
    %36 = sbr.rel (0) target = $region29
  $region28: #{forward.6} parent=0 // pred_region
    _
  $region29: #{forward.6} parent=0 // pred_fallthru
    _
  // Predicated region
  $region30: #{forward.6} parent=0 // pred_check
    _
  $region31: #{forward.6} parent=0 // pred_check_branch
    %38 = sbr.rel (0) target = $region33
  $region32: #{forward.6} parent=0 // pred_region
    _
  $region33: #{forward.6} parent=0 // pred_fallthru
    _
  // Predicated region
  $region34: #{forward.6} parent=0 // pred_check
    _
  $region35: #{forward.6} parent=0 // pred_check_branch
    %40 = sbr.rel (0) target = $region37
  $region36: #{forward.6} parent=0 // pred_region
    _
  $region37: #{forward.6} parent=0 // pred_fallthru
    _
  // Predicated region
  $region38: #{forward.6} parent=0 // pred_check
    _
  $region39: #{forward.6} parent=0 // pred_check_branch
    %42 = sbr.rel (0) target = $region41
  $region40: #{forward.6} parent=0 // pred_region
    _
  $region41: #{forward.6} parent=0 // pred_fallthru
    _
  // Predicated region
  $region42: #{forward.6} parent=0 // pred_check
    _
  $region43: #{forward.6} parent=0 // pred_check_branch
    %44 = sbr.rel (0) target = $region45
  $region44: #{forward.6} parent=0 // pred_region
    _
  $region45: #{forward.6} parent=0 // pred_fallthru
    _
  // Predicated region
  $region46: #{forward.6} parent=0 // pred_check
    _
  $region47: #{forward.6} parent=0 // pred_check_branch
    %46 = sbr.rel (0) target = $region49
  $region48: #{forward.6} parent=0 // pred_region
    _
  $region49: #{forward.6} parent=0 // pred_fallthru
    _
  // Predicated region
  $region50: #{forward.6} parent=0 // pred_check
    _
  $region51: #{forward.6} parent=0 // pred_check_branch
    %48 = sbr.rel (0) target = $region53
  $region52: #{forward.6} parent=0 // pred_region
    _
  $region53: #{forward.6} parent=0 // pred_fallthru
    _
  // Predicated region
  $region54: #{forward.6} parent=0 // pred_check
    _
  $region55: #{forward.6} parent=0 // pred_check_branch
    %50 = sbr.rel (0) target = $region57
  $region56: #{forward.6} parent=0 // pred_region
    _
  $region57: #{forward.6} parent=0 // pred_fallthru
    _
  // Predicated region
  $region58: #{forward.6} parent=0 // pred_check
    _
  $region59: #{forward.6} parent=0 // pred_check_branch
    %52 = sbr.rel (0) target = $region61
  $region60: #{forward.6} parent=0 // pred_region
    _
  $region61: #{forward.6} parent=0 // pred_fallthru
    _
  // Predicated region
  $region62: #{forward.6} parent=0 // pred_check
    _
  $region63: #{forward.6} parent=0 // pred_check_branch
    %54 = sbr.rel (0) target = $region65
  $region64: #{forward.6} parent=0 // pred_region
    _
  $region65: #{forward.6} parent=0 // pred_fallthru
    _
  %v58 = vld [vmem:[%s0] sm:$0xff]
  %v59 = vld [vmem:[%s0 + $0x8] sm:$0xff]
  %v60 = vld [vmem:[%s0 + $0x10] sm:$0xff]
  %v61 = vpack.c.bf16 %v59, %v58
  %v62 = vpack.c.bf16 %v60, %v60
  %v63 = vld [vmem:[%s2] sm:$0xf]
  %v64 = vld [vmem:[%s2 + $0x4] sm:$0xf]
  %v65 = vld [vmem:[%s2 + $0x8] sm:$0xf]
  %v66 = vld [vmem:[%s2 + $0xc] sm:$0xf]
  %v67 = vld [vmem:[%s4] sm:$0x1]
  %v69 = vlaneseq
  %v70 = vshrl.u32 %v69, 7
  %v71 = vsub.s32 0, %v70
  %v72 = vrot.slane %v67, %v71
  %v78 = vunpack.c.l.b16 %v63
  %v79 = vunpack.c.l.b16 %v64
  %v80 = vunpack.c.l.b16 %v65
  %v81 = vunpack.c.l.b16 %v66
  %v82 = vpack.c.b16 %v79, %v78
  %v83 = vpack.c.b16 %v81, %v80
  %vm86 = vcmask 261120
  %v88 = vsel %vm86, %v61, 0
  %v91 = vsel %vm86, %v62, 0
  %93 = vmatprep.subr.bf16.mxu0 0
  %94 = vmatpush1.bf16.msra.mxu0 0
  %95 = vmatprep.subr.bf16.mxu0 0
  %96 = vmatpush1.bf16.msra.mxu0 0
  %97 = vmatprep.subr.bf16.mxu0 0
  %98 = vmatpush1.bf16.msra.mxu0 0
  %99 = vmatprep.subr.bf16.mxu0 0
  %100 = vmatpush1.bf16.msra.mxu0 0
  %101 = vmatprep.subr.bf16.mxu0 0
  %102 = vmatpush1.bf16.msra.mxu0 0
  %103 = vmatprep.subr.bf16.mxu0 0
  %104 = vmatpush1.bf16.msra.mxu0 0
  %105 = vmatprep.subr.bf16.mxu0 0
  %106 = vmatpush1.bf16.msra.mxu0 %v83
  %107 = vmatprep.subr.bf16.mxu0 0
  %108 = vmatpush1.bf16.msra.mxu0 %v82
  %109 = vmatprep.subr.bf16.mxu0 0
  %110 = vmatpush2.bf16.msra.mxu0 0
  %111 = vmatprep.subr.bf16.mxu0 0
  %112 = vmatpush2.bf16.msra.mxu0 0
  %113 = vmatprep.subr.bf16.mxu0 0
  %114 = vmatpush2.bf16.msra.mxu0 0
  %115 = vmatprep.subr.bf16.mxu0 0
  %116 = vmatpush2.bf16.msra.mxu0 0
  %117 = vmatprep.subr.bf16.mxu0 0
  %118 = vmatpush2.bf16.msra.mxu0 0
  %119 = vmatprep.subr.bf16.mxu0 0
  %120 = vmatpush2.bf16.msra.mxu0 0
  %121 = vmatprep.subr.bf16.mxu0 0
  %122 = vmatpush2.bf16.msra.mxu0 0
  %123 = vmatprep.subr.bf16.mxu0 0
  %124 = vmatpush2.bf16.msra.mxu0 0
  %125 = vmatprep.mubr.bf16.mxu0 0
  %126 = vmatmul.mubr.bf16.gmra.mxu0 %v88
  %v127 = vpop.f32.mrf.mxu0
  %v128 = vadd.f32 %v72, %v127
  %v129 = vpop.f32.mrf.mxu0
  %v130 = vpop.f32.mrf.mxu0
  %v131 = vadd.f32 %v72, %v130
  %v132 = vpop.f32.mrf.mxu0
  %133 = vmatprep.mubr.bf16.mxu0 0
  %134 = vmatmul.mubr.bf16.gmra.mxu0 %v91
  %v135 = vpop.f32.mrf.mxu0
  %v136 = vadd.f32 %v72, %v135
  %v137 = vpop.f32.mrf.mxu0
  %v138 = vpop.f32.mrf.mxu0
  %v139 = vpop.f32.mrf.mxu0
  %140 = vdwg.mxu0
  %141 = vst.msk [vmem:[#allocation2] sm:$0xff] %vm86, 0.0
  %142 = vst.msk [vmem:[#allocation2 + $0x8] sm:$0xff] %vm86, 0.0
  %143 = vst.msk [vmem:[#allocation2 + $0x10] sm:$0xff] %vm86, 0.0
  %v144 = vld [vmem:[%s1] sm:$0xff]
  %v145 = vld [vmem:[%s1 + $0x8] sm:$0xff]
  %v146 = vpack.c.bf16 %v145, %v144
  %v147 = vld [vmem:[%s3] sm:$0xf]
  %v148 = vld [vmem:[%s3 + $0x4] sm:$0xf]
  %v149 = vld [vmem:[%s3 + $0x8] sm:$0xf]
  %v150 = vld [vmem:[%s3 + $0xc] sm:$0xf]
  %v151 = vld [vmem:[%s5] sm:$0x1]
  %v153 = vlaneseq
  %v154 = vshrl.u32 %v153, 7
  %v155 = vsub.s32 0, %v154
  %v156 = vrot.slane %v151, %v155
  %v162 = vunpack.c.l.b16 %v147
  %v163 = vunpack.c.l.b16 %v148
  %v164 = vunpack.c.l.b16 %v149
  %v165 = vunpack.c.l.b16 %v150
  %v166 = vpack.c.b16 %v163, %v162
  %v167 = vpack.c.b16 %v165, %v164
  %v171 = vsel %vm86, %v146, 0
  %173 = vmatprep.subr.bf16.mxu0 0
  %174 = vmatpush1.bf16.msra.mxu0 0
  %175 = vmatprep.subr.bf16.mxu0 0
  %176 = vmatpush1.bf16.msra.mxu0 0
  %177 = vmatprep.subr.bf16.mxu0 0
  %178 = vmatpush1.bf16.msra.mxu0 0
  %179 = vmatprep.subr.bf16.mxu0 0
  %180 = vmatpush1.bf16.msra.mxu0 0
  %181 = vmatprep.subr.bf16.mxu0 0
  %182 = vmatpush1.bf16.msra.mxu0 0
  %183 = vmatprep.subr.bf16.mxu0 0
  %184 = vmatpush1.bf16.msra.mxu0 0
  %185 = vmatprep.subr.bf16.mxu0 0
  %186 = vmatpush1.bf16.msra.mxu0 %v167
  %187 = vmatprep.subr.bf16.mxu0 0
  %188 = vmatpush1.bf16.msra.mxu0 %v166
  %189 = vmatprep.subr.bf16.mxu0 0
  %190 = vmatpush2.bf16.msra.mxu0 0
  %191 = vmatprep.subr.bf16.mxu0 0
  %192 = vmatpush2.bf16.msra.mxu0 0
  %193 = vmatprep.subr.bf16.mxu0 0
  %194 = vmatpush2.bf16.msra.mxu0 0
  %195 = vmatprep.subr.bf16.mxu0 0
  %196 = vmatpush2.bf16.msra.mxu0 0
  %197 = vmatprep.subr.bf16.mxu0 0
  %198 = vmatpush2.bf16.msra.mxu0 0
  %199 = vmatprep.subr.bf16.mxu0 0
  %200 = vmatpush2.bf16.msra.mxu0 0
  %201 = vmatprep.subr.bf16.mxu0 0
  %202 = vmatpush2.bf16.msra.mxu0 0
  %203 = vmatprep.subr.bf16.mxu0 0
  %204 = vmatpush2.bf16.msra.mxu0 0
  %205 = vmatprep.mubr.bf16.mxu0 0
  %206 = vmatmul.mubr.bf16.gmra.mxu0 %v171
  %v207 = vpop.f32.mrf.mxu0
  %v208 = vadd.f32 %v156, %v207
  %v209 = vpop.f32.mrf.mxu0
  %v210 = vpop.f32.mrf.mxu0
  %v211 = vadd.f32 %v156, %v210
  %v212 = vpop.f32.mrf.mxu0
  %213 = vdwg.mxu0
  %214 = vst.msk [vmem:[#allocation3] sm:$0xff] %vm86, 0.0
  %215 = vst.msk [vmem:[#allocation3 + $0x8] sm:$0xff] %vm86, 0.0
  %v216 = vld [vmem:[%s14] sm:$0x3]
  %v217 = vld [vmem:[%s14 + $0x2] sm:$0x3]
  %vm218 = vnez %v216
  %vm219 = vnez %v217
  %v220 = vld [vmem:[%s10] sm:$0xf]
  %v221 = vld [vmem:[%s10 + $0x4] sm:$0xf]
  %v222 = vld [vmem:[%s10 + $0x8] sm:$0xf]
  %v223 = vld [vmem:[%s10 + $0xc] sm:$0xf]
  %v224 = vld [vmem:[%s12] sm:$0xf]
  %v225 = vld [vmem:[%s12 + $0x4] sm:$0xf]
  %v226 = vld [vmem:[%s12 + $0x8] sm:$0xf]
  %v227 = vld [vmem:[%s12 + $0xc] sm:$0xf]
  %v228 = vpack.c.bf16 %v131, %v128
  %v229 = vpack.c.bf16 %v136, %v136
  %v232 = vunpack.c.l.b16 %v220
  %v233 = vunpack.c.l.b16 %v221
  %v234 = vpack.c.b16 %v233, %v232
  %vm236 = vcmask 130048
  %v238 = vsel %vm236, %v228, 0
  %v241 = vsel %vm236, %v229, 0
  %243 = vmatprep.subr.bf16.mxu0 0
  %244 = vmatpush1.bf16.msra.mxu0 0
  %245 = vmatprep.subr.bf16.mxu0 0
  %246 = vmatpush1.bf16.msra.mxu0 0
  %247 = vmatprep.subr.bf16.mxu0 0
  %248 = vmatpush1.bf16.msra.mxu0 0
  %249 = vmatprep.subr.bf16.mxu0 0
  %250 = vmatpush1.bf16.msra.mxu0 0
  %251 = vmatprep.subr.bf16.mxu0 0
  %252 = vmatpush1.bf16.msra.mxu0 0
  %253 = vmatprep.subr.bf16.mxu0 0
  %254 = vmatpush1.bf16.msra.mxu0 0
  %255 = vmatprep.subr.bf16.mxu0 0
  %256 = vmatpush1.bf16.msra.mxu0 0
  %257 = vmatprep.subr.bf16.mxu0 0
  %258 = vmatpush1.bf16.msra.mxu0 %v234
  %259 = vmatprep.subr.bf16.mxu0 0
  %260 = vmatpush2.bf16.msra.mxu0 0
  %261 = vmatprep.subr.bf16.mxu0 0
  %262 = vmatpush2.bf16.msra.mxu0 0
  %263 = vmatprep.subr.bf16.mxu0 0
  %264 = vmatpush2.bf16.msra.mxu0 0
  %265 = vmatprep.subr.bf16.mxu0 0
  %266 = vmatpush2.bf16.msra.mxu0 0
  %267 = vmatprep.subr.bf16.mxu0 0
  %268 = vmatpush2.bf16.msra.mxu0 0
  %269 = vmatprep.subr.bf16.mxu0 0
  %270 = vmatpush2.bf16.msra.mxu0 0
  %271 = vmatprep.subr.bf16.mxu0 0
  %272 = vmatpush2.bf16.msra.mxu0 0
  %273 = vmatprep.subr.bf16.mxu0 0
  %274 = vmatpush2.bf16.msra.mxu0 0
  %275 = vmatprep.mubr.bf16.mxu0 0
  %276 = vmatmul.mubr.bf16.gmra.mxu0 %v238
  %v277 = vpop.f32.mrf.mxu0
  %v278 = vadd.f32 0.0, %v277
  %v279 = vpop.f32.mrf.mxu0
  %v280 = vpop.f32.mrf.mxu0
  %v281 = vadd.f32 0.0, %v280
  %v282 = vpop.f32.mrf.mxu0
  %283 = vmatprep.mubr.bf16.mxu0 0
  %284 = vmatmul.mubr.bf16.gmra.mxu0 %v241
  %v285 = vpop.f32.mrf.mxu0
  %v286 = vadd.f32 0.0, %v285
  %v287 = vpop.f32.mrf.mxu0
  %v288 = vpop.f32.mrf.mxu0
  %v289 = vpop.f32.mrf.mxu0
  %290 = vdwg.mxu0
  %v291 = vpack.c.bf16 %v281, %v278
  %v292 = vpack.c.bf16 %v286, %v286
  %295 = vrot.lane.b32.xlu0 %v228, 64
  %v296 = vpop.permute.xlu0 %295
  %297 = vrot.lane.b32.xlu0 %v229, 64
  %v298 = vpop.permute.xlu0 %297
  %v301 = vunpack.c.l.b16 %v224
  %v302 = vunpack.c.l.b16 %v225
  %v303 = vpack.c.b16 %v302, %v301
  %v306 = vsel %vm236, %v296, 0
  %v309 = vsel %vm236, %v298, 0
  %311 = vmatprep.subr.bf16.mxu0 0
  %312 = vmatpush1.bf16.msra.mxu0 0
  %313 = vmatprep.subr.bf16.mxu0 0
  %314 = vmatpush1.bf16.msra.mxu0 0
  %315 = vmatprep.subr.bf16.mxu0 0
  %316 = vmatpush1.bf16.msra.mxu0 0
  %317 = vmatprep.subr.bf16.mxu0 0
  %318 = vmatpush1.bf16.msra.mxu0 0
  %319 = vmatprep.subr.bf16.mxu0 0
  %320 = vmatpush1.bf16.msra.mxu0 0
  %321 = vmatprep.subr.bf16.mxu0 0
  %322 = vmatpush1.bf16.msra.mxu0 0
  %323 = vmatprep.subr.bf16.mxu0 0
  %324 = vmatpush1.bf16.msra.mxu0 0
  %325 = vmatprep.subr.bf16.mxu0 0
  %326 = vmatpush1.bf16.msra.mxu0 %v303
  %327 = vmatprep.subr.bf16.mxu0 0
  %328 = vmatpush2.bf16.msra.mxu0 0
  %329 = vmatprep.subr.bf16.mxu0 0
  %330 = vmatpush2.bf16.msra.mxu0 0
  %331 = vmatprep.subr.bf16.mxu0 0
  %332 = vmatpush2.bf16.msra.mxu0 0
  %333 = vmatprep.subr.bf16.mxu0 0
  %334 = vmatpush2.bf16.msra.mxu0 0
  %335 = vmatprep.subr.bf16.mxu0 0
  %336 = vmatpush2.bf16.msra.mxu0 0
  %337 = vmatprep.subr.bf16.mxu0 0
  %338 = vmatpush2.bf16.msra.mxu0 0
  %339 = vmatprep.subr.bf16.mxu0 0
  %340 = vmatpush2.bf16.msra.mxu0 0
  %341 = vmatprep.subr.bf16.mxu0 0
  %342 = vmatpush2.bf16.msra.mxu0 0
  %343 = vmatprep.mubr.bf16.mxu0 0
  %344 = vmatmul.mubr.bf16.gmra.mxu0 %v306
  %v345 = vpop.f32.mrf.mxu0
  %v346 = vadd.f32 0.0, %v345
  %v347 = vpop.f32.mrf.mxu0
  %v348 = vpop.f32.mrf.mxu0
  %v349 = vadd.f32 0.0, %v348
  %v350 = vpop.f32.mrf.mxu0
  %351 = vmatprep.mubr.bf16.mxu0 0
  %352 = vmatmul.mubr.bf16.gmra.mxu0 %v309
  %v353 = vpop.f32.mrf.mxu0
  %v354 = vadd.f32 0.0, %v353
  %v355 = vpop.f32.mrf.mxu0
  %v356 = vpop.f32.mrf.mxu0
  %v357 = vpop.f32.mrf.mxu0
  %358 = vdwg.mxu0
  %v359 = vpack.c.bf16 %v349, %v346
  %v360 = vpack.c.bf16 %v354, %v354
  %v361 = vpack.c.bf16 %v211, %v208
  %363 = vrot.lane.b32.xlu0 %v361, 96
  %v364 = vpop.permute.xlu0 %363
  %v366 = vsel %vm236, %v364, 0
  %v369 = vsel %vm236, %v291, 0
  %v372 = vsel %vm236, %v292, 0
  %374 = vmatprep.subr.bf16.mxu0 0
  %375 = vmatpush1.bf16.xpose.msra.mxu0 0
  %376 = vmatprep.subr.bf16.mxu0 0
  %377 = vmatpush1.bf16.xpose.msra.mxu0 0
  %378 = vmatprep.subr.bf16.mxu0 0
  %379 = vmatpush1.bf16.xpose.msra.mxu0 0
  %380 = vmatprep.subr.bf16.mxu0 0
  %381 = vmatpush1.bf16.xpose.msra.mxu0 0
  %382 = vmatprep.subr.bf16.mxu0 0
  %383 = vmatpush1.bf16.xpose.msra.mxu0 0
  %384 = vmatprep.subr.bf16.mxu0 0
  %385 = vmatpush1.bf16.xpose.msra.mxu0 0
  %386 = vmatprep.subr.bf16.mxu0 0
  %387 = vmatpush1.bf16.xpose.msra.mxu0 %v372
  %388 = vmatprep.subr.bf16.mxu0 0
  %389 = vmatpush1.bf16.xpose.msra.mxu0 %v369
  %390 = vmatprep.subr.bf16.mxu0 0
  %391 = vmatpush2.bf16.xpose.msra.mxu0 0
  %392 = vmatprep.subr.bf16.mxu0 0
  %393 = vmatpush2.bf16.xpose.msra.mxu0 0
  %394 = vmatprep.subr.bf16.mxu0 0
  %395 = vmatpush2.bf16.xpose.msra.mxu0 0
  %396 = vmatprep.subr.bf16.mxu0 0
  %397 = vmatpush2.bf16.xpose.msra.mxu0 0
  %398 = vmatprep.subr.bf16.mxu0 0
  %399 = vmatpush2.bf16.xpose.msra.mxu0 0
  %400 = vmatprep.subr.bf16.mxu0 0
  %401 = vmatpush2.bf16.xpose.msra.mxu0 0
  %402 = vmatprep.subr.bf16.mxu0 0
  %403 = vmatpush2.bf16.xpose.msra.mxu0 0
  %404 = vmatprep.subr.bf16.mxu0 0
  %405 = vmatpush2.bf16.xpose.msra.mxu0 0
  %406 = vmatprep.mubr.bf16.mxu0 0
  %407 = vmatmul.mubr.bf16.gmra.mxu0 %v366
  %v408 = vpop.f32.mrf.mxu0
  %v409 = vadd.f32 0.0, %v408
  %v410 = vpop.f32.mrf.mxu0
  %v411 = vpop.f32.mrf.mxu0
  %v412 = vadd.f32 0.0, %v411
  %v413 = vpop.f32.mrf.mxu0
  %414 = vdwg.mxu0
  %v415 = vsel %vm218, 16843009, 0
  %v416 = vsel %vm219, 16843009, 0
  %v417 = vunpack.c.0.s8 %v415
  %v418 = vunpack.c.0.s8 %v416
  %vm419 = vcmp.ne.s32.totalorder %v417, 0
  %vm420 = vcmp.ne.s32.totalorder %v418, 0
  %v421 = vsel %vm419, %v409, -1e+30
  %v422 = vsel %vm420, %v412, -1e+30
  %vm423 = vcmask 195584
  %v424 = vsel %vm423, %v421, -inf
  %425 = vmax.xlane.f32.xlu0 %v424
  %v426 = vpop.xlane.xlu0 %425
  %v427 = vsel %vm423, %v422, -inf
  %428 = vmax.xlane.f32.xlu0 %v427
  %v429 = vpop.xlane.xlu0 %428
  %v430 = vsub.f32 %v421, %v426
  %v431 = vsub.f32 %v422, %v429
  %v432 = vmul.f32 %v430, 1.442695
  %v433 = vpow.pop %v432
  %v434 = vmul.f32 %v431, 1.442695
  %v435 = vpow.pop %v434
  %v436 = vsel %vm419, %v433, 0.0
  %v437 = vsel %vm420, %v435, 0.0
  %v438 = vsel %vm423, %v436, 0.0
  %439 = vadd.xlane.f32.xlu0 %v438
  %v440 = vpop.xlane.xlu0 %439
  %v441 = vsel %vm423, %v437, 0.0
  %442 = vadd.xlane.f32.xlu0 %v441
  %v443 = vpop.xlane.xlu0 %442
  %v444 = vmax.f32 %v440, 1e-30
  %v445 = vmax.f32 %v443, 1e-30
  %v446 = vrcp.pop %v444
  %v447 = vrcp.pop %v445
  %v448 = vmul.f32 %v436, %v446
  %v449 = vmul.f32 %v437, %v447
  %v450 = vpack.c.bf16 %v449, %v448
  %v452 = vsel %vm423, %v450, 0
  %vm454 = vcmask 1043456
  %v456 = vsel %vm454, %v360, 0
  %458 = vmatprep.subr.bf16.mxu0 0
  %459 = vmatpush1.bf16.msra.mxu0 0
  %460 = vmatprep.subr.bf16.mxu0 0
  %461 = vmatpush1.bf16.msra.mxu0 0
  %462 = vmatprep.subr.bf16.mxu0 0
  %463 = vmatpush1.bf16.msra.mxu0 0
  %464 = vmatprep.subr.bf16.mxu0 0
  %465 = vmatpush1.bf16.msra.mxu0 0
  %466 = vmatprep.subr.bf16.mxu0 0
  %467 = vmatpush1.bf16.msra.mxu0 0
  %468 = vmatprep.subr.bf16.mxu0 0
  %469 = vmatpush1.bf16.msra.mxu0 0
  %470 = vmatprep.subr.bf16.mxu0 0
  %471 = vmatpush1.bf16.msra.mxu0 %v456
  %472 = vmatprep.subr.bf16.mxu0 0
  %473 = vmatpush1.bf16.msra.mxu0 %v359
  %474 = vmatprep.subr.bf16.mxu0 0
  %475 = vmatpush2.bf16.msra.mxu0 0
  %476 = vmatprep.subr.bf16.mxu0 0
  %477 = vmatpush2.bf16.msra.mxu0 0
  %478 = vmatprep.subr.bf16.mxu0 0
  %479 = vmatpush2.bf16.msra.mxu0 0
  %480 = vmatprep.subr.bf16.mxu0 0
  %481 = vmatpush2.bf16.msra.mxu0 0
  %482 = vmatprep.subr.bf16.mxu0 0
  %483 = vmatpush2.bf16.msra.mxu0 0
  %484 = vmatprep.subr.bf16.mxu0 0
  %485 = vmatpush2.bf16.msra.mxu0 0
  %486 = vmatprep.subr.bf16.mxu0 0
  %487 = vmatpush2.bf16.msra.mxu0 0
  %488 = vmatprep.subr.bf16.mxu0 0
  %489 = vmatpush2.bf16.msra.mxu0 0
  %490 = vmatprep.mubr.bf16.mxu0 0
  %491 = vmatmul.mubr.bf16.gmra.mxu0 %v452
  %v492 = vpop.f32.mrf.mxu0
  %v493 = vadd.f32 0.0, %v492
  %v494 = vpop.f32.mrf.mxu0
  %v495 = vpop.f32.mrf.mxu0
  %v496 = vadd.f32 0.0, %v495
  %v497 = vpop.f32.mrf.mxu0
  %498 = vdwg.mxu0
  %v499 = vld [vmem:[#allocation3] sm:$0xff]
  %v500 = vld [vmem:[#allocation3 + $0x8] sm:$0xff]
  %v501 = vadd.f32 %v499, %v493
  %v502 = vadd.f32 %v500, %v496
  %503 = vst.msk [vmem:[#allocation3] sm:$0xff] %vm236, %v501
  %504 = vst.msk [vmem:[#allocation3 + $0x8] sm:$0xff] %vm236, %v502
  %505 = vrot.lane.b32.xlu0 %v228, 112
  %v506 = vpop.permute.xlu0 %505
  %507 = vrot.lane.b32.xlu0 %v229, 112
  %v508 = vpop.permute.xlu0 %507
  %v511 = vunpack.c.l.b16 %v222
  %v512 = vunpack.c.l.b16 %v223
  %v513 = vpack.c.b16 %v512, %v511
  %v516 = vsel %vm236, %v506, 0
  %v519 = vsel %vm236, %v508, 0
  %521 = vmatprep.subr.bf16.mxu0 0
  %522 = vmatpush1.bf16.msra.mxu0 0
  %523 = vmatprep.subr.bf16.mxu0 0
  %524 = vmatpush1.bf16.msra.mxu0 0
  %525 = vmatprep.subr.bf16.mxu0 0
  %526 = vmatpush1.bf16.msra.mxu0 0
  %527 = vmatprep.subr.bf16.mxu0 0
  %528 = vmatpush1.bf16.msra.mxu0 0
  %529 = vmatprep.subr.bf16.mxu0 0
  %530 = vmatpush1.bf16.msra.mxu0 0
  %531 = vmatprep.subr.bf16.mxu0 0
  %532 = vmatpush1.bf16.msra.mxu0 0
  %533 = vmatprep.subr.bf16.mxu0 0
  %534 = vmatpush1.bf16.msra.mxu0 0
  %535 = vmatprep.subr.bf16.mxu0 0
  %536 = vmatpush1.bf16.msra.mxu0 %v513
  %537 = vmatprep.subr.bf16.mxu0 0
  %538 = vmatpush2.bf16.msra.mxu0 0
  %539 = vmatprep.subr.bf16.mxu0 0
  %540 = vmatpush2.bf16.msra.mxu0 0
  %541 = vmatprep.subr.bf16.mxu0 0
  %542 = vmatpush2.bf16.msra.mxu0 0
  %543 = vmatprep.subr.bf16.mxu0 0
  %544 = vmatpush2.bf16.msra.mxu0 0
  %545 = vmatprep.subr.bf16.mxu0 0
  %546 = vmatpush2.bf16.msra.mxu0 0
  %547 = vmatprep.subr.bf16.mxu0 0
  %548 = vmatpush2.bf16.msra.mxu0 0
  %549 = vmatprep.subr.bf16.mxu0 0
  %550 = vmatpush2.bf16.msra.mxu0 0
  %551 = vmatprep.subr.bf16.mxu0 0
  %552 = vmatpush2.bf16.msra.mxu0 0
  %553 = vmatprep.mubr.bf16.mxu0 0
  %554 = vmatmul.mubr.bf16.gmra.mxu0 %v516
  %v555 = vpop.f32.mrf.mxu0
  %v556 = vadd.f32 0.0, %v555
  %v557 = vpop.f32.mrf.mxu0
  %v558 = vpop.f32.mrf.mxu0
  %v559 = vadd.f32 0.0, %v558
  %v560 = vpop.f32.mrf.mxu0
  %561 = vmatprep.mubr.bf16.mxu0 0
  %562 = vmatmul.mubr.bf16.gmra.mxu0 %v519
  %v563 = vpop.f32.mrf.mxu0
  %v564 = vadd.f32 0.0, %v563
  %v565 = vpop.f32.mrf.mxu0
  %v566 = vpop.f32.mrf.mxu0
  %v567 = vpop.f32.mrf.mxu0
  %568 = vdwg.mxu0
  %v569 = vpack.c.bf16 %v559, %v556
  %v570 = vpack.c.bf16 %v564, %v564
  %571 = vrot.lane.b32.xlu0 %v228, 48
  %v572 = vpop.permute.xlu0 %571
  %573 = vrot.lane.b32.xlu0 %v229, 48
  %v574 = vpop.permute.xlu0 %573
  %v577 = vunpack.c.l.b16 %v226
  %v578 = vunpack.c.l.b16 %v227
  %v579 = vpack.c.b16 %v578, %v577
  %v582 = vsel %vm236, %v572, 0
  %v585 = vsel %vm236, %v574, 0
  %587 = vmatprep.subr.bf16.mxu0 0
  %588 = vmatpush1.bf16.msra.mxu0 0
  %589 = vmatprep.subr.bf16.mxu0 0
  %590 = vmatpush1.bf16.msra.mxu0 0
  %591 = vmatprep.subr.bf16.mxu0 0
  %592 = vmatpush1.bf16.msra.mxu0 0
  %593 = vmatprep.subr.bf16.mxu0 0
  %594 = vmatpush1.bf16.msra.mxu0 0
  %595 = vmatprep.subr.bf16.mxu0 0
  %596 = vmatpush1.bf16.msra.mxu0 0
  %597 = vmatprep.subr.bf16.mxu0 0
  %598 = vmatpush1.bf16.msra.mxu0 0
  %599 = vmatprep.subr.bf16.mxu0 0
  %600 = vmatpush1.bf16.msra.mxu0 0
  %601 = vmatprep.subr.bf16.mxu0 0
  %602 = vmatpush1.bf16.msra.mxu0 %v579
  %603 = vmatprep.subr.bf16.mxu0 0
  %604 = vmatpush2.bf16.msra.mxu0 0
  %605 = vmatprep.subr.bf16.mxu0 0
  %606 = vmatpush2.bf16.msra.mxu0 0
  %607 = vmatprep.subr.bf16.mxu0 0
  %608 = vmatpush2.bf16.msra.mxu0 0
  %609 = vmatprep.subr.bf16.mxu0 0
  %610 = vmatpush2.bf16.msra.mxu0 0
  %611 = vmatprep.subr.bf16.mxu0 0
  %612 = vmatpush2.bf16.msra.mxu0 0
  %613 = vmatprep.subr.bf16.mxu0 0
  %614 = vmatpush2.bf16.msra.mxu0 0
  %615 = vmatprep.subr.bf16.mxu0 0
  %616 = vmatpush2.bf16.msra.mxu0 0
  %617 = vmatprep.subr.bf16.mxu0 0
  %618 = vmatpush2.bf16.msra.mxu0 0
  %619 = vmatprep.mubr.bf16.mxu0 0
  %620 = vmatmul.mubr.bf16.gmra.mxu0 %v582
  %v621 = vpop.f32.mrf.mxu0
  %v622 = vadd.f32 0.0, %v621
  %v623 = vpop.f32.mrf.mxu0
  %v624 = vpop.f32.mrf.mxu0
  %v625 = vadd.f32 0.0, %v624
  %v626 = vpop.f32.mrf.mxu0
  %627 = vmatprep.mubr.bf16.mxu0 0
  %628 = vmatmul.mubr.bf16.gmra.mxu0 %v585
  %v629 = vpop.f32.mrf.mxu0
  %v630 = vadd.f32 0.0, %v629
  %v631 = vpop.f32.mrf.mxu0
  %v632 = vpop.f32.mrf.mxu0
  %v633 = vpop.f32.mrf.mxu0
  %634 = vdwg.mxu0
  %v635 = vpack.c.bf16 %v625, %v622
  %v636 = vpack.c.bf16 %v630, %v630
  %637 = vrot.lane.b32.xlu0 %v361, 80
  %v638 = vpop.permute.xlu0 %637
  %v640 = vsel %vm236, %v638, 0
  %v643 = vsel %vm236, %v569, 0
  %v646 = vsel %vm236, %v570, 0
  %648 = vmatprep.subr.bf16.mxu0 0
  %649 = vmatpush1.bf16.xpose.msra.mxu0 0
  %650 = vmatprep.subr.bf16.mxu0 0
  %651 = vmatpush1.bf16.xpose.msra.mxu0 0
  %652 = vmatprep.subr.bf16.mxu0 0
  %653 = vmatpush1.bf16.xpose.msra.mxu0 0
  %654 = vmatprep.subr.bf16.mxu0 0
  %655 = vmatpush1.bf16.xpose.msra.mxu0 0
  %656 = vmatprep.subr.bf16.mxu0 0
  %657 = vmatpush1.bf16.xpose.msra.mxu0 0
  %658 = vmatprep.subr.bf16.mxu0 0
  %659 = vmatpush1.bf16.xpose.msra.mxu0 0
  %660 = vmatprep.subr.bf16.mxu0 0
  %661 = vmatpush1.bf16.xpose.msra.mxu0 %v646
  %662 = vmatprep.subr.bf16.mxu0 0
  %663 = vmatpush1.bf16.xpose.msra.mxu0 %v643
  %664 = vmatprep.subr.bf16.mxu0 0
  %665 = vmatpush2.bf16.xpose.msra.mxu0 0
  %666 = vmatprep.subr.bf16.mxu0 0
  %667 = vmatpush2.bf16.xpose.msra.mxu0 0
  %668 = vmatprep.subr.bf16.mxu0 0
  %669 = vmatpush2.bf16.xpose.msra.mxu0 0
  %670 = vmatprep.subr.bf16.mxu0 0
  %671 = vmatpush2.bf16.xpose.msra.mxu0 0
  %672 = vmatprep.subr.bf16.mxu0 0
  %673 = vmatpush2.bf16.xpose.msra.mxu0 0
  %674 = vmatprep.subr.bf16.mxu0 0
  %675 = vmatpush2.bf16.xpose.msra.mxu0 0
  %676 = vmatprep.subr.bf16.mxu0 0
  %677 = vmatpush2.bf16.xpose.msra.mxu0 0
  %678 = vmatprep.subr.bf16.mxu0 0
  %679 = vmatpush2.bf16.xpose.msra.mxu0 0
  %680 = vmatprep.mubr.bf16.mxu0 0
  %681 = vmatmul.mubr.bf16.gmra.mxu0 %v640
  %v682 = vpop.f32.mrf.mxu0
  %v683 = vadd.f32 0.0, %v682
  %v684 = vpop.f32.mrf.mxu0
  %v685 = vpop.f32.mrf.mxu0
  %v686 = vadd.f32 0.0, %v685
  %v687 = vpop.f32.mrf.mxu0
  %688 = vdwg.mxu0
  %v689 = vsel %vm419, %v683, -1e+30
  %v690 = vsel %vm420, %v686, -1e+30
  %v691 = vsel %vm423, %v689, -inf
  %692 = vmax.xlane.f32.xlu0 %v691
  %v693 = vpop.xlane.xlu0 %692
  %v694 = vsel %vm423, %v690, -inf
  %695 = vmax.xlane.f32.xlu0 %v694
  %v696 = vpop.xlane.xlu0 %695
  %v697 = vsub.f32 %v689, %v693
  %v698 = vsub.f32 %v690, %v696
  %v699 = vmul.f32 %v697, 1.442695
  %v700 = vpow.pop %v699
  %v701 = vmul.f32 %v698, 1.442695
  %v702 = vpow.pop %v701
  %v703 = vsel %vm419, %v700, 0.0
  %v704 = vsel %vm420, %v702, 0.0
  %v705 = vsel %vm423, %v703, 0.0
  %706 = vadd.xlane.f32.xlu0 %v705
  %v707 = vpop.xlane.xlu0 %706
  %v708 = vsel %vm423, %v704, 0.0
  %709 = vadd.xlane.f32.xlu0 %v708
  %v710 = vpop.xlane.xlu0 %709
  %v711 = vmax.f32 %v707, 1e-30
  %v712 = vmax.f32 %v710, 1e-30
  %v713 = vrcp.pop %v711
  %v714 = vrcp.pop %v712
  %v715 = vmul.f32 %v703, %v713
  %v716 = vmul.f32 %v704, %v714
  %v717 = vpack.c.bf16 %v716, %v715
  %v719 = vsel %vm423, %v717, 0
  %v722 = vsel %vm454, %v636, 0
  %724 = vmatprep.subr.bf16.mxu0 0
  %725 = vmatpush1.bf16.msra.mxu0 0
  %726 = vmatprep.subr.bf16.mxu0 0
  %727 = vmatpush1.bf16.msra.mxu0 0
  %728 = vmatprep.subr.bf16.mxu0 0
  %729 = vmatpush1.bf16.msra.mxu0 0
  %730 = vmatprep.subr.bf16.mxu0 0
  %731 = vmatpush1.bf16.msra.mxu0 0
  %732 = vmatprep.subr.bf16.mxu0 0
  %733 = vmatpush1.bf16.msra.mxu0 0
  %734 = vmatprep.subr.bf16.mxu0 0
  %735 = vmatpush1.bf16.msra.mxu0 0
  %736 = vmatprep.subr.bf16.mxu0 0
  %737 = vmatpush1.bf16.msra.mxu0 %v722
  %738 = vmatprep.subr.bf16.mxu0 0
  %739 = vmatpush1.bf16.msra.mxu0 %v635
  %740 = vmatprep.subr.bf16.mxu0 0
  %741 = vmatpush2.bf16.msra.mxu0 0
  %742 = vmatprep.subr.bf16.mxu0 0
  %743 = vmatpush2.bf16.msra.mxu0 0
  %744 = vmatprep.subr.bf16.mxu0 0
  %745 = vmatpush2.bf16.msra.mxu0 0
  %746 = vmatprep.subr.bf16.mxu0 0
  %747 = vmatpush2.bf16.msra.mxu0 0
  %748 = vmatprep.subr.bf16.mxu0 0
  %749 = vmatpush2.bf16.msra.mxu0 0
  %750 = vmatprep.subr.bf16.mxu0 0
  %751 = vmatpush2.bf16.msra.mxu0 0
  %752 = vmatprep.subr.bf16.mxu0 0
  %753 = vmatpush2.bf16.msra.mxu0 0
  %754 = vmatprep.subr.bf16.mxu0 0
  %755 = vmatpush2.bf16.msra.mxu0 0
  %756 = vmatprep.mubr.bf16.mxu0 0
  %757 = vmatmul.mubr.bf16.gmra.mxu0 %v719
  %v758 = vpop.f32.mrf.mxu0
  %v759 = vadd.f32 0.0, %v758
  %v760 = vpop.f32.mrf.mxu0
  %v761 = vpop.f32.mrf.mxu0
  %v762 = vadd.f32 0.0, %v761
  %v763 = vpop.f32.mrf.mxu0
  %764 = vdwg.mxu0
  %v765 = vld [vmem:[#allocation3] sm:$0xff]
  %v766 = vld [vmem:[#allocation3 + $0x8] sm:$0xff]
  %769 = vrot.lane.b32.xlu0 %v759, 16
  %v770 = vpop.permute.xlu0 %769
  %771 = vrot.lane.b32.xlu0 %v762, 16
  %v772 = vpop.permute.xlu0 %771
  %v775 = vadd.f32 %v765, %v770
  %v776 = vadd.f32 %v766, %v772
  %vm777 = vcmask 261248
  %778 = vst.msk [vmem:[#allocation3] sm:$0xff] %vm777, %v775
  %779 = vst.msk [vmem:[#allocation3 + $0x8] sm:$0xff] %vm777, %v776
  %v780 = vld [vmem:[%s15] sm:$0x3]
  %v781 = vld [vmem:[%s15 + $0x2] sm:$0x3]
  %v782 = vld [vmem:[%s15 + $0x4] sm:$0x3]
  %vm783 = vnez %v780
  %vm784 = vnez %v781
  %vm785 = vnez %v782
  %v786 = vld [vmem:[%s11] sm:$0xf]
  %v787 = vld [vmem:[%s11 + $0x4] sm:$0xf]
  %v788 = vld [vmem:[%s11 + $0x8] sm:$0xf]
  %v789 = vld [vmem:[%s11 + $0xc] sm:$0xf]
  %v790 = vld [vmem:[%s13] sm:$0xf]
  %v791 = vld [vmem:[%s13 + $0x4] sm:$0xf]
  %v792 = vld [vmem:[%s13 + $0x8] sm:$0xf]
  %v793 = vld [vmem:[%s13 + $0xc] sm:$0xf]
  %v796 = vunpack.c.l.b16 %v786
  %v797 = vunpack.c.l.b16 %v787
  %v798 = vpack.c.b16 %v797, %v796
  %v801 = vsel %vm236, %v361, 0
  %803 = vmatprep.subr.bf16.mxu0 0
  %804 = vmatpush1.bf16.msra.mxu0 0
  %805 = vmatprep.subr.bf16.mxu0 0
  %806 = vmatpush1.bf16.msra.mxu0 0
  %807 = vmatprep.subr.bf16.mxu0 0
  %808 = vmatpush1.bf16.msra.mxu0 0
  %809 = vmatprep.subr.bf16.mxu0 0
  %810 = vmatpush1.bf16.msra.mxu0 0
  %811 = vmatprep.subr.bf16.mxu0 0
  %812 = vmatpush1.bf16.msra.mxu0 0
  %813 = vmatprep.subr.bf16.mxu0 0
  %814 = vmatpush1.bf16.msra.mxu0 0
  %815 = vmatprep.subr.bf16.mxu0 0
  %816 = vmatpush1.bf16.msra.mxu0 0
  %817 = vmatprep.subr.bf16.mxu0 0
  %818 = vmatpush1.bf16.msra.mxu0 %v798
  %819 = vmatprep.subr.bf16.mxu0 0
  %820 = vmatpush2.bf16.msra.mxu0 0
  %821 = vmatprep.subr.bf16.mxu0 0
  %822 = vmatpush2.bf16.msra.mxu0 0
  %823 = vmatprep.subr.bf16.mxu0 0
  %824 = vmatpush2.bf16.msra.mxu0 0
  %825 = vmatprep.subr.bf16.mxu0 0
  %826 = vmatpush2.bf16.msra.mxu0 0
  %827 = vmatprep.subr.bf16.mxu0 0
  %828 = vmatpush2.bf16.msra.mxu0 0
  %829 = vmatprep.subr.bf16.mxu0 0
  %830 = vmatpush2.bf16.msra.mxu0 0
  %831 = vmatprep.subr.bf16.mxu0 0
  %832 = vmatpush2.bf16.msra.mxu0 0
  %833 = vmatprep.subr.bf16.mxu0 0
  %834 = vmatpush2.bf16.msra.mxu0 0
  %835 = vmatprep.mubr.bf16.mxu0 0
  %836 = vmatmul.mubr.bf16.gmra.mxu0 %v801
  %v837 = vpop.f32.mrf.mxu0
  %v838 = vadd.f32 0.0, %v837
  %v839 = vpop.f32.mrf.mxu0
  %v840 = vpop.f32.mrf.mxu0
  %v841 = vadd.f32 0.0, %v840
  %v842 = vpop.f32.mrf.mxu0
  %843 = vdwg.mxu0
  %v844 = vpack.c.bf16 %v841, %v838
  %845 = vrot.lane.b32.xlu0 %v361, 64
  %v846 = vpop.permute.xlu0 %845
  %v849 = vunpack.c.l.b16 %v790
  %v850 = vunpack.c.l.b16 %v791
  %v851 = vpack.c.b16 %v850, %v849
  %v854 = vsel %vm236, %v846, 0
  %856 = vmatprep.subr.bf16.mxu0 0
  %857 = vmatpush1.bf16.msra.mxu0 0
  %858 = vmatprep.subr.bf16.mxu0 0
  %859 = vmatpush1.bf16.msra.mxu0 0
  %860 = vmatprep.subr.bf16.mxu0 0
  %861 = vmatpush1.bf16.msra.mxu0 0
  %862 = vmatprep.subr.bf16.mxu0 0
  %863 = vmatpush1.bf16.msra.mxu0 0
  %864 = vmatprep.subr.bf16.mxu0 0
  %865 = vmatpush1.bf16.msra.mxu0 0
  %866 = vmatprep.subr.bf16.mxu0 0
  %867 = vmatpush1.bf16.msra.mxu0 0
  %868 = vmatprep.subr.bf16.mxu0 0
  %869 = vmatpush1.bf16.msra.mxu0 0
  %870 = vmatprep.subr.bf16.mxu0 0
  %871 = vmatpush1.bf16.msra.mxu0 %v851
  %872 = vmatprep.subr.bf16.mxu0 0
  %873 = vmatpush2.bf16.msra.mxu0 0
  %874 = vmatprep.subr.bf16.mxu0 0
  %875 = vmatpush2.bf16.msra.mxu0 0
  %876 = vmatprep.subr.bf16.mxu0 0
  %877 = vmatpush2.bf16.msra.mxu0 0
  %878 = vmatprep.subr.bf16.mxu0 0
  %879 = vmatpush2.bf16.msra.mxu0 0
  %880 = vmatprep.subr.bf16.mxu0 0
  %881 = vmatpush2.bf16.msra.mxu0 0
  %882 = vmatprep.subr.bf16.mxu0 0
  %883 = vmatpush2.bf16.msra.mxu0 0
  %884 = vmatprep.subr.bf16.mxu0 0
  %885 = vmatpush2.bf16.msra.mxu0 0
  %886 = vmatprep.subr.bf16.mxu0 0
  %887 = vmatpush2.bf16.msra.mxu0 0
  %888 = vmatprep.mubr.bf16.mxu0 0
  %889 = vmatmul.mubr.bf16.gmra.mxu0 %v854
  %v890 = vpop.f32.mrf.mxu0
  %v891 = vadd.f32 0.0, %v890
  %v892 = vpop.f32.mrf.mxu0
  %v893 = vpop.f32.mrf.mxu0
  %v894 = vadd.f32 0.0, %v893
  %v895 = vpop.f32.mrf.mxu0
  %896 = vdwg.mxu0
  %v897 = vpack.c.bf16 %v894, %v891
  %898 = vrot.lane.b32.xlu0 %v228, 96
  %v899 = vpop.permute.xlu0 %898
  %900 = vrot.lane.b32.xlu0 %v229, 96
  %v901 = vpop.permute.xlu0 %900
  %v903 = vsel %vm236, %v899, 0
  %v906 = vsel %vm236, %v901, 0
  %v909 = vsel %vm236, %v844, 0
  %911 = vmatprep.subr.bf16.mxu0 0
  %912 = vmatpush1.bf16.xpose.msra.mxu0 0
  %913 = vmatprep.subr.bf16.mxu0 0
  %914 = vmatpush1.bf16.xpose.msra.mxu0 0
  %915 = vmatprep.subr.bf16.mxu0 0
  %916 = vmatpush1.bf16.xpose.msra.mxu0 0
  %917 = vmatprep.subr.bf16.mxu0 0
  %918 = vmatpush1.bf16.xpose.msra.mxu0 0
  %919 = vmatprep.subr.bf16.mxu0 0
  %920 = vmatpush1.bf16.xpose.msra.mxu0 0
  %921 = vmatprep.subr.bf16.mxu0 0
  %922 = vmatpush1.bf16.xpose.msra.mxu0 0
  %923 = vmatprep.subr.bf16.mxu0 0
  %924 = vmatpush1.bf16.xpose.msra.mxu0 0
  %925 = vmatprep.subr.bf16.mxu0 0
  %926 = vmatpush1.bf16.xpose.msra.mxu0 %v909
  %927 = vmatprep.subr.bf16.mxu0 0
  %928 = vmatpush2.bf16.xpose.msra.mxu0 0
  %929 = vmatprep.subr.bf16.mxu0 0
  %930 = vmatpush2.bf16.xpose.msra.mxu0 0
  %931 = vmatprep.subr.bf16.mxu0 0
  %932 = vmatpush2.bf16.xpose.msra.mxu0 0
  %933 = vmatprep.subr.bf16.mxu0 0
  %934 = vmatpush2.bf16.xpose.msra.mxu0 0
  %935 = vmatprep.subr.bf16.mxu0 0
  %936 = vmatpush2.bf16.xpose.msra.mxu0 0
  %937 = vmatprep.subr.bf16.mxu0 0
  %938 = vmatpush2.bf16.xpose.msra.mxu0 0
  %939 = vmatprep.subr.bf16.mxu0 0
  %940 = vmatpush2.bf16.xpose.msra.mxu0 0
  %941 = vmatprep.subr.bf16.mxu0 0
  %942 = vmatpush2.bf16.xpose.msra.mxu0 0
  %943 = vmatprep.mubr.bf16.mxu0 0
  %944 = vmatmul.mubr.bf16.gmra.mxu0 %v903
  %v945 = vpop.f32.mrf.mxu0
  %v946 = vadd.f32 0.0, %v945
  %v947 = vpop.f32.mrf.mxu0
  %v948 = vpop.f32.mrf.mxu0
  %v949 = vadd.f32 0.0, %v948
  %v950 = vpop.f32.mrf.mxu0
  %951 = vmatprep.mubr.bf16.mxu0 0
  %952 = vmatmul.mubr.bf16.gmra.mxu0 %v906
  %v953 = vpop.f32.mrf.mxu0
  %v954 = vadd.f32 0.0, %v953
  %v955 = vpop.f32.mrf.mxu0
  %v956 = vpop.f32.mrf.mxu0
  %v957 = vpop.f32.mrf.mxu0
  %958 = vdwg.mxu0
  %v959 = vsel %vm783, 16843009, 0
  %v960 = vsel %vm784, 16843009, 0
  %v961 = vsel %vm785, 16843009, 0
  %v962 = vunpack.c.0.s8 %v959
  %v963 = vunpack.c.0.s8 %v960
  %v964 = vunpack.c.0.s8 %v961
  %vm965 = vcmp.ne.s32.totalorder %v962, 0
  %vm966 = vcmp.ne.s32.totalorder %v963, 0
  %vm967 = vcmp.ne.s32.totalorder %v964, 0
  %v968 = vsel %vm965, %v946, -1e+30
  %v969 = vsel %vm966, %v949, -1e+30
  %v970 = vsel %vm967, %v954, -1e+30
  %v971 = vsel %vm236, %v968, -inf
  %972 = vmax.xlane.f32.xlu0 %v971
  %v973 = vpop.xlane.xlu0 %972
  %v974 = vsel %vm236, %v969, -inf
  %975 = vmax.xlane.f32.xlu0 %v974
  %v976 = vpop.xlane.xlu0 %975
  %v977 = vsel %vm236, %v970, -inf
  %978 = vmax.xlane.f32.xlu0 %v977
  %v979 = vpop.xlane.xlu0 %978
  %v980 = vsub.f32 %v968, %v973
  %v981 = vsub.f32 %v969, %v976
  %v982 = vsub.f32 %v970, %v979
  %v983 = vmul.f32 %v980, 1.442695
  %v984 = vpow.pop %v983
  %v985 = vmul.f32 %v981, 1.442695
  %v986 = vpow.pop %v985
  %v987 = vmul.f32 %v982, 1.442695
  %v988 = vpow.pop %v987
  %v989 = vsel %vm965, %v984, 0.0
  %v990 = vsel %vm966, %v986, 0.0
  %v991 = vsel %vm967, %v988, 0.0
  %v992 = vsel %vm236, %v989, 0.0
  %993 = vadd.xlane.f32.xlu0 %v992
  %v994 = vpop.xlane.xlu0 %993
  %v995 = vsel %vm236, %v990, 0.0
  %996 = vadd.xlane.f32.xlu0 %v995
  %v997 = vpop.xlane.xlu0 %996
  %v998 = vsel %vm236, %v991, 0.0
  %999 = vadd.xlane.f32.xlu0 %v998
  %v1000 = vpop.xlane.xlu0 %999
  %v1001 = vmax.f32 %v994, 1e-30
  %v1002 = vmax.f32 %v997, 1e-30
  %v1003 = vmax.f32 %v1000, 1e-30
  %v1004 = vrcp.pop %v1001
  %v1005 = vrcp.pop %v1002
  %v1006 = vrcp.pop %v1003
  %v1007 = vmul.f32 %v989, %v1004
  %v1008 = vmul.f32 %v990, %v1005
  %v1009 = vmul.f32 %v991, %v1006
  %v1010 = vpack.c.bf16 %v1008, %v1007
  %v1011 = vpack.c.bf16 %v1009, %v1009
  %v1013 = vsel %vm236, %v1010, 0
  %v1016 = vsel %vm236, %v1011, 0
  %1018 = vmatprep.subr.bf16.mxu0 0
  %1019 = vmatpush1.bf16.msra.mxu0 0
  %1020 = vmatprep.subr.bf16.mxu0 0
  %1021 = vmatpush1.bf16.msra.mxu0 0
  %1022 = vmatprep.subr.bf16.mxu0 0
  %1023 = vmatpush1.bf16.msra.mxu0 0
  %1024 = vmatprep.subr.bf16.mxu0 0
  %1025 = vmatpush1.bf16.msra.mxu0 0
  %1026 = vmatprep.subr.bf16.mxu0 0
  %1027 = vmatpush1.bf16.msra.mxu0 0
  %1028 = vmatprep.subr.bf16.mxu0 0
  %1029 = vmatpush1.bf16.msra.mxu0 0
  %1030 = vmatprep.subr.bf16.mxu0 0
  %1031 = vmatpush1.bf16.msra.mxu0 0
  %1032 = vmatprep.subr.bf16.mxu0 0
  %1033 = vmatpush1.bf16.msra.mxu0 %v897
  %1034 = vmatprep.subr.bf16.mxu0 0
  %1035 = vmatpush2.bf16.msra.mxu0 0
  %1036 = vmatprep.subr.bf16.mxu0 0
  %1037 = vmatpush2.bf16.msra.mxu0 0
  %1038 = vmatprep.subr.bf16.mxu0 0
  %1039 = vmatpush2.bf16.msra.mxu0 0
  %1040 = vmatprep.subr.bf16.mxu0 0
  %1041 = vmatpush2.bf16.msra.mxu0 0
  %1042 = vmatprep.subr.bf16.mxu0 0
  %1043 = vmatpush2.bf16.msra.mxu0 0
  %1044 = vmatprep.subr.bf16.mxu0 0
  %1045 = vmatpush2.bf16.msra.mxu0 0
  %1046 = vmatprep.subr.bf16.mxu0 0
  %1047 = vmatpush2.bf16.msra.mxu0 0
  %1048 = vmatprep.subr.bf16.mxu0 0
  %1049 = vmatpush2.bf16.msra.mxu0 0
  %1050 = vmatprep.mubr.bf16.mxu0 0
  %1051 = vmatmul.mubr.bf16.gmra.mxu0 %v1013
  %v1052 = vpop.f32.mrf.mxu0
  %v1053 = vadd.f32 0.0, %v1052
  %v1054 = vpop.f32.mrf.mxu0
  %v1055 = vpop.f32.mrf.mxu0
  %v1056 = vadd.f32 0.0, %v1055
  %v1057 = vpop.f32.mrf.mxu0
  %1058 = vmatprep.mubr.bf16.mxu0 0
  %1059 = vmatmul.mubr.bf16.gmra.mxu0 %v1016
  %v1060 = vpop.f32.mrf.mxu0
  %v1061 = vadd.f32 0.0, %v1060
  %v1062 = vpop.f32.mrf.mxu0
  %v1063 = vpop.f32.mrf.mxu0
  %v1064 = vpop.f32.mrf.mxu0
  %1065 = vdwg.mxu0
  %v1066 = vld [vmem:[#allocation2] sm:$0xff]
  %v1067 = vld [vmem:[#allocation2 + $0x8] sm:$0xff]
  %v1068 = vld [vmem:[#allocation2 + $0x10] sm:$0xff]
  %v1069 = vadd.f32 %v1066, %v1053
  %v1070 = vadd.f32 %v1067, %v1056
  %v1071 = vadd.f32 %v1068, %v1061
  %1072 = vst.msk [vmem:[#allocation2] sm:$0xff] %vm236, %v1069
  %1073 = vst.msk [vmem:[#allocation2 + $0x8] sm:$0xff] %vm236, %v1070
  %1074 = vst.msk [vmem:[#allocation2 + $0x10] sm:$0xff] %vm236, %v1071
  %1075 = vrot.lane.b32.xlu0 %v361, 112
  %v1076 = vpop.permute.xlu0 %1075
  %v1079 = vunpack.c.l.b16 %v788
  %v1080 = vunpack.c.l.b16 %v789
  %v1081 = vpack.c.b16 %v1080, %v1079
  %v1084 = vsel %vm236, %v1076, 0
  %1086 = vmatprep.subr.bf16.mxu0 0
  %1087 = vmatpush1.bf16.msra.mxu0 0
  %1088 = vmatprep.subr.bf16.mxu0 0
  %1089 = vmatpush1.bf16.msra.mxu0 0
  %1090 = vmatprep.subr.bf16.mxu0 0
  %1091 = vmatpush1.bf16.msra.mxu0 0
  %1092 = vmatprep.subr.bf16.mxu0 0
  %1093 = vmatpush1.bf16.msra.mxu0 0
  %1094 = vmatprep.subr.bf16.mxu0 0
  %1095 = vmatpush1.bf16.msra.mxu0 0
  %1096 = vmatprep.subr.bf16.mxu0 0
  %1097 = vmatpush1.bf16.msra.mxu0 0
  %1098 = vmatprep.subr.bf16.mxu0 0
  %1099 = vmatpush1.bf16.msra.mxu0 0
  %1100 = vmatprep.subr.bf16.mxu0 0
  %1101 = vmatpush1.bf16.msra.mxu0 %v1081
  %1102 = vmatprep.subr.bf16.mxu0 0
  %1103 = vmatpush2.bf16.msra.mxu0 0
  %1104 = vmatprep.subr.bf16.mxu0 0
  %1105 = vmatpush2.bf16.msra.mxu0 0
  %1106 = vmatprep.subr.bf16.mxu0 0
  %1107 = vmatpush2.bf16.msra.mxu0 0
  %1108 = vmatprep.subr.bf16.mxu0 0
  %1109 = vmatpush2.bf16.msra.mxu0 0
  %1110 = vmatprep.subr.bf16.mxu0 0
  %1111 = vmatpush2.bf16.msra.mxu0 0
  %1112 = vmatprep.subr.bf16.mxu0 0
  %1113 = vmatpush2.bf16.msra.mxu0 0
  %1114 = vmatprep.subr.bf16.mxu0 0
  %1115 = vmatpush2.bf16.msra.mxu0 0
  %1116 = vmatprep.subr.bf16.mxu0 0
  %1117 = vmatpush2.bf16.msra.mxu0 0
  %1118 = vmatprep.mubr.bf16.mxu0 0
  %1119 = vmatmul.mubr.bf16.gmra.mxu0 %v1084
  %v1120 = vpop.f32.mrf.mxu0
  %v1121 = vadd.f32 0.0, %v1120
  %v1122 = vpop.f32.mrf.mxu0
  %v1123 = vpop.f32.mrf.mxu0
  %v1124 = vadd.f32 0.0, %v1123
  %v1125 = vpop.f32.mrf.mxu0
  %1126 = vdwg.mxu0
  %v1127 = vpack.c.bf16 %v1124, %v1121
  %1128 = vrot.lane.b32.xlu0 %v361, 48
  %v1129 = vpop.permute.xlu0 %1128
  %v1132 = vunpack.c.l.b16 %v792
  %v1133 = vunpack.c.l.b16 %v793
  %v1134 = vpack.c.b16 %v1133, %v1132
  %v1137 = vsel %vm236, %v1129, 0
  %1139 = vmatprep.subr.bf16.mxu0 0
  %1140 = vmatpush1.bf16.msra.mxu0 0
  %1141 = vmatprep.subr.bf16.mxu0 0
  %1142 = vmatpush1.bf16.msra.mxu0 0
  %1143 = vmatprep.subr.bf16.mxu0 0
  %1144 = vmatpush1.bf16.msra.mxu0 0
  %1145 = vmatprep.subr.bf16.mxu0 0
  %1146 = vmatpush1.bf16.msra.mxu0 0
  %1147 = vmatprep.subr.bf16.mxu0 0
  %1148 = vmatpush1.bf16.msra.mxu0 0
  %1149 = vmatprep.subr.bf16.mxu0 0
  %1150 = vmatpush1.bf16.msra.mxu0 0
  %1151 = vmatprep.subr.bf16.mxu0 0
  %1152 = vmatpush1.bf16.msra.mxu0 0
  %1153 = vmatprep.subr.bf16.mxu0 0
  %1154 = vmatpush1.bf16.msra.mxu0 %v1134
  %1155 = vmatprep.subr.bf16.mxu0 0
  %1156 = vmatpush2.bf16.msra.mxu0 0
  %1157 = vmatprep.subr.bf16.mxu0 0
  %1158 = vmatpush2.bf16.msra.mxu0 0
  %1159 = vmatprep.subr.bf16.mxu0 0
  %1160 = vmatpush2.bf16.msra.mxu0 0
  %1161 = vmatprep.subr.bf16.mxu0 0
  %1162 = vmatpush2.bf16.msra.mxu0 0
  %1163 = vmatprep.subr.bf16.mxu0 0
  %1164 = vmatpush2.bf16.msra.mxu0 0
  %1165 = vmatprep.subr.bf16.mxu0 0
  %1166 = vmatpush2.bf16.msra.mxu0 0
  %1167 = vmatprep.subr.bf16.mxu0 0
  %1168 = vmatpush2.bf16.msra.mxu0 0
  %1169 = vmatprep.subr.bf16.mxu0 0
  %1170 = vmatpush2.bf16.msra.mxu0 0
  %1171 = vmatprep.mubr.bf16.mxu0 0
  %1172 = vmatmul.mubr.bf16.gmra.mxu0 %v1137
  %v1173 = vpop.f32.mrf.mxu0
  %v1174 = vadd.f32 0.0, %v1173
  %v1175 = vpop.f32.mrf.mxu0
  %v1176 = vpop.f32.mrf.mxu0
  %v1177 = vadd.f32 0.0, %v1176
  %v1178 = vpop.f32.mrf.mxu0
  %1179 = vdwg.mxu0
  %v1180 = vpack.c.bf16 %v1177, %v1174
  %1181 = vrot.lane.b32.xlu0 %v228, 80
  %v1182 = vpop.permute.xlu0 %1181
  %1183 = vrot.lane.b32.xlu0 %v229, 80
  %v1184 = vpop.permute.xlu0 %1183
  %v1186 = vsel %vm236, %v1182, 0
  %v1189 = vsel %vm236, %v1184, 0
  %v1192 = vsel %vm236, %v1127, 0
  %1194 = vmatprep.subr.bf16.mxu0 0
  %1195 = vmatpush1.bf16.xpose.msra.mxu0 0
  %1196 = vmatprep.subr.bf16.mxu0 0
  %1197 = vmatpush1.bf16.xpose.msra.mxu0 0
  %1198 = vmatprep.subr.bf16.mxu0 0
  %1199 = vmatpush1.bf16.xpose.msra.mxu0 0
  %1200 = vmatprep.subr.bf16.mxu0 0
  %1201 = vmatpush1.bf16.xpose.msra.mxu0 0
  %1202 = vmatprep.subr.bf16.mxu0 0
  %1203 = vmatpush1.bf16.xpose.msra.mxu0 0
  %1204 = vmatprep.subr.bf16.mxu0 0
  %1205 = vmatpush1.bf16.xpose.msra.mxu0 0
  %1206 = vmatprep.subr.bf16.mxu0 0
  %1207 = vmatpush1.bf16.xpose.msra.mxu0 0
  %1208 = vmatprep.subr.bf16.mxu0 0
  %1209 = vmatpush1.bf16.xpose.msra.mxu0 %v1192
  %1210 = vmatprep.subr.bf16.mxu0 0
  %1211 = vmatpush2.bf16.xpose.msra.mxu0 0
  %1212 = vmatprep.subr.bf16.mxu0 0
  %1213 = vmatpush2.bf16.xpose.msra.mxu0 0
  %1214 = vmatprep.subr.bf16.mxu0 0
  %1215 = vmatpush2.bf16.xpose.msra.mxu0 0
  %1216 = vmatprep.subr.bf16.mxu0 0
  %1217 = vmatpush2.bf16.xpose.msra.mxu0 0
  %1218 = vmatprep.subr.bf16.mxu0 0
  %1219 = vmatpush2.bf16.xpose.msra.mxu0 0
  %1220 = vmatprep.subr.bf16.mxu0 0
  %1221 = vmatpush2.bf16.xpose.msra.mxu0 0
  %1222 = vmatprep.subr.bf16.mxu0 0
  %1223 = vmatpush2.bf16.xpose.msra.mxu0 0
  %1224 = vmatprep.subr.bf16.mxu0 0
  %1225 = vmatpush2.bf16.xpose.msra.mxu0 0
  %1226 = vmatprep.mubr.bf16.mxu0 0
  %1227 = vmatmul.mubr.bf16.gmra.mxu0 %v1186
  %v1228 = vpop.f32.mrf.mxu0
  %v1229 = vadd.f32 0.0, %v1228
  %v1230 = vpop.f32.mrf.mxu0
  %v1231 = vpop.f32.mrf.mxu0
  %v1232 = vadd.f32 0.0, %v1231
  %v1233 = vpop.f32.mrf.mxu0
  %1234 = vmatprep.mubr.bf16.mxu0 0
  %1235 = vmatmul.mubr.bf16.gmra.mxu0 %v1189
  %v1236 = vpop.f32.mrf.mxu0
  %v1237 = vadd.f32 0.0, %v1236
  %v1238 = vpop.f32.mrf.mxu0
  %v1239 = vpop.f32.mrf.mxu0
  %v1240 = vpop.f32.mrf.mxu0
  %1241 = vdwg.mxu0
  %v1242 = vsel %vm965, %v1229, -1e+30
  %v1243 = vsel %vm966, %v1232, -1e+30
  %v1244 = vsel %vm967, %v1237, -1e+30
  %v1245 = vsel %vm236, %v1242, -inf
  %1246 = vmax.xlane.f32.xlu0 %v1245
  %v1247 = vpop.xlane.xlu0 %1246
  %v1248 = vsel %vm236, %v1243, -inf
  %1249 = vmax.xlane.f32.xlu0 %v1248
  %v1250 = vpop.xlane.xlu0 %1249
  %v1251 = vsel %vm236, %v1244, -inf
  %1252 = vmax.xlane.f32.xlu0 %v1251
  %v1253 = vpop.xlane.xlu0 %1252
  %v1254 = vsub.f32 %v1242, %v1247
  %v1255 = vsub.f32 %v1243, %v1250
  %v1256 = vsub.f32 %v1244, %v1253
  %v1257 = vmul.f32 %v1254, 1.442695
  %v1258 = vpow.pop %v1257
  %v1259 = vmul.f32 %v1255, 1.442695
  %v1260 = vpow.pop %v1259
  %v1261 = vmul.f32 %v1256, 1.442695
  %v1262 = vpow.pop %v1261
  %v1263 = vsel %vm965, %v1258, 0.0
  %v1264 = vsel %vm966, %v1260, 0.0
  %v1265 = vsel %vm967, %v1262, 0.0
  %v1266 = vsel %vm236, %v1263, 0.0
  %1267 = vadd.xlane.f32.xlu0 %v1266
  %v1268 = vpop.xlane.xlu0 %1267
  %v1269 = vsel %vm236, %v1264, 0.0
  %1270 = vadd.xlane.f32.xlu0 %v1269
  %v1271 = vpop.xlane.xlu0 %1270
  %v1272 = vsel %vm236, %v1265, 0.0
  %1273 = vadd.xlane.f32.xlu0 %v1272
  %v1274 = vpop.xlane.xlu0 %1273
  %v1275 = vmax.f32 %v1268, 1e-30
  %v1276 = vmax.f32 %v1271, 1e-30
  %v1277 = vmax.f32 %v1274, 1e-30
  %v1278 = vrcp.pop %v1275
  %v1279 = vrcp.pop %v1276
  %v1280 = vrcp.pop %v1277
  %v1281 = vmul.f32 %v1263, %v1278
  %v1282 = vmul.f32 %v1264, %v1279
  %v1283 = vmul.f32 %v1265, %v1280
  %v1284 = vpack.c.bf16 %v1282, %v1281
  %v1285 = vpack.c.bf16 %v1283, %v1283
  %v1287 = vsel %vm236, %v1284, 0
  %v1290 = vsel %vm236, %v1285, 0
  %1292 = vmatprep.subr.bf16.mxu0 0
  %1293 = vmatpush1.bf16.msra.mxu0 0
  %1294 = vmatprep.subr.bf16.mxu0 0
  %1295 = vmatpush1.bf16.msra.mxu0 0
  %1296 = vmatprep.subr.bf16.mxu0 0
  %1297 = vmatpush1.bf16.msra.mxu0 0
  %1298 = vmatprep.subr.bf16.mxu0 0
  %1299 = vmatpush1.bf16.msra.mxu0 0
  %1300 = vmatprep.subr.bf16.mxu0 0
  %1301 = vmatpush1.bf16.msra.mxu0 0
  %1302 = vmatprep.subr.bf16.mxu0 0
  %1303 = vmatpush1.bf16.msra.mxu0 0
  %1304 = vmatprep.subr.bf16.mxu0 0
  %1305 = vmatpush1.bf16.msra.mxu0 0
  %1306 = vmatprep.subr.bf16.mxu0 0
  %1307 = vmatpush1.bf16.msra.mxu0 %v1180
  %1308 = vmatprep.subr.bf16.mxu0 0
  %1309 = vmatpush2.bf16.msra.mxu0 0
  %1310 = vmatprep.subr.bf16.mxu0 0
  %1311 = vmatpush2.bf16.msra.mxu0 0
  %1312 = vmatprep.subr.bf16.mxu0 0
  %1313 = vmatpush2.bf16.msra.mxu0 0
  %1314 = vmatprep.subr.bf16.mxu0 0
  %1315 = vmatpush2.bf16.msra.mxu0 0
  %1316 = vmatprep.subr.bf16.mxu0 0
  %1317 = vmatpush2.bf16.msra.mxu0 0
  %1318 = vmatprep.subr.bf16.mxu0 0
  %1319 = vmatpush2.bf16.msra.mxu0 0
  %1320 = vmatprep.subr.bf16.mxu0 0
  %1321 = vmatpush2.bf16.msra.mxu0 0
  %1322 = vmatprep.subr.bf16.mxu0 0
  %1323 = vmatpush2.bf16.msra.mxu0 0
  %1324 = vmatprep.mubr.bf16.mxu0 0
  %1325 = vmatmul.mubr.bf16.gmra.mxu0 %v1287
  %v1326 = vpop.f32.mrf.mxu0
  %v1327 = vadd.f32 0.0, %v1326
  %v1328 = vpop.f32.mrf.mxu0
  %v1329 = vpop.f32.mrf.mxu0
  %v1330 = vadd.f32 0.0, %v1329
  %v1331 = vpop.f32.mrf.mxu0
  %1332 = vmatprep.mubr.bf16.mxu0 0
  %1333 = vmatmul.mubr.bf16.gmra.mxu0 %v1290
  %v1334 = vpop.f32.mrf.mxu0
  %v1335 = vadd.f32 0.0, %v1334
  %v1336 = vpop.f32.mrf.mxu0
  %v1337 = vpop.f32.mrf.mxu0
  %v1338 = vpop.f32.mrf.mxu0
  %1339 = vdwg.mxu0
  %v1340 = vld [vmem:[#allocation2] sm:$0xff]
  %v1341 = vld [vmem:[#allocation2 + $0x8] sm:$0xff]
  %v1342 = vld [vmem:[#allocation2 + $0x10] sm:$0xff]
  %1346 = vrot.lane.b32.xlu0 %v1327, 16
  %v1347 = vpop.permute.xlu0 %1346
  %1348 = vrot.lane.b32.xlu0 %v1330, 16
  %v1349 = vpop.permute.xlu0 %1348
  %1350 = vrot.lane.b32.xlu0 %v1335, 16
  %v1351 = vpop.permute.xlu0 %1350
  %v1355 = vadd.f32 %v1340, %v1347
  %v1356 = vadd.f32 %v1341, %v1349
  %v1357 = vadd.f32 %v1342, %v1351
  %1358 = vst.msk [vmem:[#allocation2] sm:$0xff] %vm777, %v1355
  %1359 = vst.msk [vmem:[#allocation2 + $0x8] sm:$0xff] %vm777, %v1356
  %1360 = vst.msk [vmem:[#allocation2 + $0x10] sm:$0xff] %vm777, %v1357
  %v1361 = vld [vmem:[#allocation2] sm:$0xff]
  %v1362 = vld [vmem:[#allocation2 + $0x8] sm:$0xff]
  %v1363 = vld [vmem:[#allocation2 + $0x10] sm:$0xff]
  %v1364 = vmul.f32 %v1361, %v1361
  %v1365 = vmul.f32 %v1362, %v1362
  %v1366 = vmul.f32 %v1363, %v1363
  %v1367 = vmul.f32 %v1361, %v1364
  %v1368 = vmul.f32 %v1362, %v1365
  %v1369 = vmul.f32 %v1363, %v1366
  %v1370 = vmul.f32 %v1367, 0.044715
  %v1371 = vmul.f32 %v1368, 0.044715
  %v1372 = vmul.f32 %v1369, 0.044715
  %v1373 = vadd.f32 %v1361, %v1370
  %v1374 = vadd.f32 %v1362, %v1371
  %v1375 = vadd.f32 %v1363, %v1372
  %v1376 = vmul.f32 %v1373, 0.7978846
  %v1377 = vmul.f32 %v1374, 0.7978846
  %v1378 = vmul.f32 %v1375, 0.7978846
  %v1379 = vtanh.pop %v1376
  %v1380 = vtanh.pop %v1377
  %v1381 = vtanh.pop %v1378
  %v1382 = vadd.f32 %v1379, 1.0
  %v1383 = vadd.f32 %v1380, 1.0
  %v1384 = vadd.f32 %v1381, 1.0
  %v1385 = vmul.f32 %v1382, 0.5
  %v1386 = vmul.f32 %v1383, 0.5
  %v1387 = vmul.f32 %v1384, 0.5
  %v1388 = vmul.f32 %v1361, %v1385
  %v1389 = vmul.f32 %v1362, %v1386
  %v1390 = vmul.f32 %v1363, %v1387
  %v1391 = vpack.c.bf16 %v1389, %v1388
  %v1392 = vpack.c.bf16 %v1390, %v1390
  %v1393 = vld [vmem:[%s6] sm:$0xf]
  %v1394 = vld [vmem:[%s6 + $0x4] sm:$0xf]
  %v1395 = vld [vmem:[%s6 + $0x8] sm:$0xf]
  %v1396 = vld [vmem:[%s6 + $0xc] sm:$0xf]
  %v1397 = vld [vmem:[%s8] sm:$0x1]
  %v1399 = vlaneseq
  %v1400 = vshrl.u32 %v1399, 7
  %v1401 = vsub.s32 0, %v1400
  %v1402 = vrot.slane %v1397, %v1401
  %v1408 = vunpack.c.l.b16 %v1393
  %v1409 = vunpack.c.l.b16 %v1394
  %v1410 = vunpack.c.l.b16 %v1395
  %v1411 = vunpack.c.l.b16 %v1396
  %v1412 = vpack.c.b16 %v1409, %v1408
  %v1413 = vpack.c.b16 %v1411, %v1410
  %v1417 = vsel %vm86, %v1391, 0
  %v1420 = vsel %vm86, %v1392, 0
  %1422 = vmatprep.subr.bf16.mxu0 0
  %1423 = vmatpush1.bf16.msra.mxu0 0
  %1424 = vmatprep.subr.bf16.mxu0 0
  %1425 = vmatpush1.bf16.msra.mxu0 0
  %1426 = vmatprep.subr.bf16.mxu0 0
  %1427 = vmatpush1.bf16.msra.mxu0 0
  %1428 = vmatprep.subr.bf16.mxu0 0
  %1429 = vmatpush1.bf16.msra.mxu0 0
  %1430 = vmatprep.subr.bf16.mxu0 0
  %1431 = vmatpush1.bf16.msra.mxu0 0
  %1432 = vmatprep.subr.bf16.mxu0 0
  %1433 = vmatpush1.bf16.msra.mxu0 0
  %1434 = vmatprep.subr.bf16.mxu0 0
  %1435 = vmatpush1.bf16.msra.mxu0 %v1413
  %1436 = vmatprep.subr.bf16.mxu0 0
  %1437 = vmatpush1.bf16.msra.mxu0 %v1412
  %1438 = vmatprep.subr.bf16.mxu0 0
  %1439 = vmatpush2.bf16.msra.mxu0 0
  %1440 = vmatprep.subr.bf16.mxu0 0
  %1441 = vmatpush2.bf16.msra.mxu0 0
  %1442 = vmatprep.subr.bf16.mxu0 0
  %1443 = vmatpush2.bf16.msra.mxu0 0
  %1444 = vmatprep.subr.bf16.mxu0 0
  %1445 = vmatpush2.bf16.msra.mxu0 0
  %1446 = vmatprep.subr.bf16.mxu0 0
  %1447 = vmatpush2.bf16.msra.mxu0 0
  %1448 = vmatprep.subr.bf16.mxu0 0
  %1449 = vmatpush2.bf16.msra.mxu0 0
  %1450 = vmatprep.subr.bf16.mxu0 0
  %1451 = vmatpush2.bf16.msra.mxu0 0
  %1452 = vmatprep.subr.bf16.mxu0 0
  %1453 = vmatpush2.bf16.msra.mxu0 0
  %1454 = vmatprep.mubr.bf16.mxu0 0
  %1455 = vmatmul.mubr.bf16.gmra.mxu0 %v1417
  %v1456 = vpop.f32.mrf.mxu0
  %v1457 = vadd.f32 %v1402, %v1456
  %v1458 = vpop.f32.mrf.mxu0
  %v1459 = vpop.f32.mrf.mxu0
  %v1460 = vadd.f32 %v1402, %v1459
  %v1461 = vpop.f32.mrf.mxu0
  %1462 = vmatprep.mubr.bf16.mxu0 0
  %1463 = vmatmul.mubr.bf16.gmra.mxu0 %v1420
  %v1464 = vpop.f32.mrf.mxu0
  %v1465 = vadd.f32 %v1402, %v1464
  %v1466 = vpop.f32.mrf.mxu0
  %v1467 = vpop.f32.mrf.mxu0
  %v1468 = vpop.f32.mrf.mxu0
  %1469 = vdwg.mxu0
  %v1470 = vadd.f32 %v1457, %v58
  %v1471 = vadd.f32 %v1460, %v59
  %v1472 = vadd.f32 %v1465, %v60
  %1473 = vst.msk [vmem:[%s16] sm:$0xff] %vm86, %v1470
  %1474 = vst.msk [vmem:[%s16 + $0x8] sm:$0xff] %vm86, %v1471
  %1475 = vst.msk [vmem:[%s16 + $0x10] sm:$0xff] %vm86, %v1472
  %v1476 = vld [vmem:[#allocation3] sm:$0xff]
  %v1477 = vld [vmem:[#allocation3 + $0x8] sm:$0xff]
  %v1478 = vmul.f32 %v1476, %v1476
  %v1479 = vmul.f32 %v1477, %v1477
  %v1480 = vmul.f32 %v1476, %v1478
  %v1481 = vmul.f32 %v1477, %v1479
  %v1482 = vmul.f32 %v1480, 0.044715
  %v1483 = vmul.f32 %v1481, 0.044715
  %v1484 = vadd.f32 %v1476, %v1482
  %v1485 = vadd.f32 %v1477, %v1483
  %v1486 = vmul.f32 %v1484, 0.7978846
  %v1487 = vmul.f32 %v1485, 0.7978846
  %v1488 = vtanh.pop %v1486
  %v1489 = vtanh.pop %v1487
  %v1490 = vadd.f32 %v1488, 1.0
  %v1491 = vadd.f32 %v1489, 1.0
  %v1492 = vmul.f32 %v1490, 0.5
  %v1493 = vmul.f32 %v1491, 0.5
  %v1494 = vmul.f32 %v1476, %v1492
  %v1495 = vmul.f32 %v1477, %v1493
  %v1496 = vpack.c.bf16 %v1495, %v1494
  %v1497 = vld [vmem:[%s7] sm:$0xf]
  %v1498 = vld [vmem:[%s7 + $0x4] sm:$0xf]
  %v1499 = vld [vmem:[%s7 + $0x8] sm:$0xf]
  %v1500 = vld [vmem:[%s7 + $0xc] sm:$0xf]
  %v1501 = vld [vmem:[%s9] sm:$0x1]
  %v1503 = vlaneseq
  %v1504 = vshrl.u32 %v1503, 7
  %v1505 = vsub.s32 0, %v1504
  %v1506 = vrot.slane %v1501, %v1505
  %v1512 = vunpack.c.l.b16 %v1497
  %v1513 = vunpack.c.l.b16 %v1498
  %v1514 = vunpack.c.l.b16 %v1499
  %v1515 = vunpack.c.l.b16 %v1500
  %v1516 = vpack.c.b16 %v1513, %v1512
  %v1517 = vpack.c.b16 %v1515, %v1514
  %v1521 = vsel %vm86, %v1496, 0
  %1523 = vmatprep.subr.bf16.mxu0 0
  %1524 = vmatpush1.bf16.msra.mxu0 0
  %1525 = vmatprep.subr.bf16.mxu0 0
  %1526 = vmatpush1.bf16.msra.mxu0 0
  %1527 = vmatprep.subr.bf16.mxu0 0
  %1528 = vmatpush1.bf16.msra.mxu0 0
  %1529 = vmatprep.subr.bf16.mxu0 0
  %1530 = vmatpush1.bf16.msra.mxu0 0
  %1531 = vmatprep.subr.bf16.mxu0 0
  %1532 = vmatpush1.bf16.msra.mxu0 0
  %1533 = vmatprep.subr.bf16.mxu0 0
  %1534 = vmatpush1.bf16.msra.mxu0 0
  %1535 = vmatprep.subr.bf16.mxu0 0
  %1536 = vmatpush1.bf16.msra.mxu0 %v1517
  %1537 = vmatprep.subr.bf16.mxu0 0
  %1538 = vmatpush1.bf16.msra.mxu0 %v1516
  %1539 = vmatprep.subr.bf16.mxu0 0
  %1540 = vmatpush2.bf16.msra.mxu0 0
  %1541 = vmatprep.subr.bf16.mxu0 0
  %1542 = vmatpush2.bf16.msra.mxu0 0
  %1543 = vmatprep.subr.bf16.mxu0 0
  %1544 = vmatpush2.bf16.msra.mxu0 0
  %1545 = vmatprep.subr.bf16.mxu0 0
  %1546 = vmatpush2.bf16.msra.mxu0 0
  %1547 = vmatprep.subr.bf16.mxu0 0
  %1548 = vmatpush2.bf16.msra.mxu0 0
  %1549 = vmatprep.subr.bf16.mxu0 0
  %1550 = vmatpush2.bf16.msra.mxu0 0
  %1551 = vmatprep.subr.bf16.mxu0 0
  %1552 = vmatpush2.bf16.msra.mxu0 0
  %1553 = vmatprep.subr.bf16.mxu0 0
  %1554 = vmatpush2.bf16.msra.mxu0 0
  %1555 = vmatprep.mubr.bf16.mxu0 0
  %1556 = vmatmul.mubr.bf16.gmra.mxu0 %v1521
  %v1557 = vpop.f32.mrf.mxu0
  %v1558 = vadd.f32 %v1506, %v1557
  %v1559 = vpop.f32.mrf.mxu0
  %v1560 = vpop.f32.mrf.mxu0
  %v1561 = vadd.f32 %v1506, %v1560
  %v1562 = vpop.f32.mrf.mxu0
  %1563 = vdwg.mxu0
  %v1564 = vadd.f32 %v1558, %v144
  %v1565 = vadd.f32 %v1561, %v145
  %1566 = vst.msk [vmem:[%s17] sm:$0xff] %vm86, %v1564
  %1567 = vst.msk [vmem:[%s17 + $0x8] sm:$0xff] %vm86, %v1565
  // Predicated region
  $region66: #{forward.6} parent=0 // pred_check
    _
  $region67: #{forward.6} parent=0 // pred_check_branch
    %1569 = sbr.rel (0) target = $region69
  $region68: #{forward.6} parent=0 // pred_region
    _
  $region69: #{forward.6} parent=0 // pred_fallthru
    _
  // Predicated region
  $region70: #{forward.6} parent=0 // pred_check
    _
  $region71: #{forward.6} parent=0 // pred_check_branch
    %1571 = sbr.rel (0) target = $region73
  $region72: #{forward.6} parent=0 // pred_region
    _
  $region73: #{forward.6} parent=0 // pred_fallthru
    _
  // Predicated region
  $region74: #{forward.6} parent=0 // pred_check
    _
  $region75: #{forward.6} parent=0 // pred_check_branch
    %1573 = sbr.rel (0) target = $region77
  $region76: #{forward.6} parent=0 // pred_region
    _
  $region77: #{forward.6} parent=0 // pred_fallthru
    _
  // Predicated region
  $region78: #{forward.6} parent=0 // pred_check
    _
  $region79: #{forward.6} parent=0 // pred_check_branch
    %1575 = sbr.rel (0) target = $region81
  $region80: #{forward.6} parent=0 // pred_region
    _
  $region81: #{forward.6} parent=0 // pred_fallthru
    _

</llo_original>
